<compile_context>
chip_gen: v7x
topology: tpu7x:2x2x1
jax: 0.10.0
libtpu: 0.0.40
codegen_flags: <defaults>
</compile_context>

<pallas_src>
import functools

import jax
import jax.numpy as jnp
from jax.experimental import pallas as pl
from jax.experimental.pallas import tpu as pltpu

# ---------------- model hyper-params (small, consistent with the module) ----
B = 2            # batch
N = 8            # seq len (query len == key len, no context)
D_MODEL = 32     # d_model
NUM_HEADS = 4
DIM_HEAD = 8
INNER = NUM_HEADS * DIM_HEAD       # 32
SCALE = DIM_HEAD ** (-0.5)


# ---------------- fused Pallas kernel ----------------------------------------
def _fused_attention_kernel(x_ref, wqkv_ref, wo_ref, bo_ref, y_ref, attn_ref,
                            *, batch, seq, num_heads, dim_head):
    # x_ref    : (B*N, D_MODEL)
    # wqkv_ref : (D_MODEL, 3*INNER)   fused [wq*SCALE | wk | wv]
    # wo_ref   : (INNER, D_MODEL)
    # bo_ref   : (1, D_MODEL)
    # y_ref    : (B*N, D_MODEL)
    # attn_ref : (B, NUM_HEADS, N, N)  float32
    inner = num_heads * dim_head
    x = x_ref[...]

    # One fused, lane-dense qkv projection over ALL batch rows: (16,32)@(32,96).
    qkv = jnp.dot(x, wqkv_ref[...], preferred_element_type=jnp.float32)

    out_heads = []
    attn_heads = []
    # Static (unrolled) loop over heads; every dot below is batched over B with
    # a leading batch dim ('bid,bjd->bij'), the canonical Mosaic-friendly form.
    for h in range(num_heads):
        q_h = qkv[:, h * dim_head:(h + 1) * dim_head].reshape(batch, seq, dim_head)
        k_h = qkv[:, inner + h * dim_head: inner + (h + 1) * dim_head].reshape(batch, seq, dim_head)
        v_h = qkv[:, 2 * inner + h * dim_head: 2 * inner + (h + 1) * dim_head].reshape(batch, seq, dim_head)

        # dots = einsum('b i d, b j d -> b i j'); SCALE already folded into wq.
        dots = jnp.einsum('bid,bjd->bij', q_h, k_h,
                          preferred_element_type=jnp.float32)

        # Numerically-stable softmax with EXACT divide (parity with F.softmax).
        dots = dots - jnp.max(dots, axis=-1, keepdims=True)
        e = jnp.exp(dots)
        attn_h = e / jnp.sum(e, axis=-1, keepdims=True)
        attn_heads.append(attn_h)

        # out_h = einsum('b i j, b j d -> b i d')
        out_heads.append(jnp.einsum('bij,bjd->bid', attn_h, v_h,
                                    preferred_element_type=jnp.float32))

    # ONE full-block store of all attention maps (was 4 sub-block stores).
    attn_ref[...] = jnp.stack(attn_heads, axis=1).astype(attn_ref.dtype)

    # Concatenate heads along lanes -> (B*N, INNER), then a SINGLE output
    # projection matmul (was 4 per-head matmuls + 3 accumulating adds).
    out = jnp.concatenate(out_heads, axis=-1).reshape(batch * seq, inner)
    y = jnp.dot(out, wo_ref[...], preferred_element_type=jnp.float32) + bo_ref[...]
    y_ref[...] = y.astype(y_ref.dtype)


# ---------------- wrapper -----------------------------------------------------
@jax.jit
def boring_attention_forward(x, fused_params):
    """x: (B, N, D_MODEL) -> (out (B, N, D_MODEL), attn (B, H, N, N) f32)."""
    b, n, d_model = x.shape
    wqkv = fused_params["wqkv"]          # (D_MODEL, 3*INNER), scale pre-folded
    wo = fused_params["wo"]              # (INNER, D_MODEL)
    bo = fused_params["bo"].reshape(1, d_model)
    x2 = x.reshape(b * n, d_model)       # fold batch into matmul rows

    inner = NUM_HEADS * DIM_HEAD
    flops = (2 * b * n * d_model * 3 * inner            # qkv projection
             + 4 * b * NUM_HEADS * n * n * DIM_HEAD     # q@k^T and attn@v
             + 2 * b * n * inner * d_model)             # output projection
    bytes_accessed = 4 * (x2.size + wqkv.size + wo.size + bo.size
                          + b * n * d_model + b * NUM_HEADS * n * n)

    kernel = functools.partial(_fused_attention_kernel, batch=b, seq=n,
                               num_heads=NUM_HEADS, dim_head=DIM_HEAD)

    y2, attn = pl.pallas_call(
        kernel,
        grid=(1,),                       # single invocation; no per-batch steps
        in_specs=[
            pl.BlockSpec((b * n, d_model), lambda i: (0, 0)),
            pl.BlockSpec(wqkv.shape, lambda i: (0, 0)),
            pl.BlockSpec(wo.shape, lambda i: (0, 0)),
            pl.BlockSpec((1, d_model), lambda i: (0, 0)),
        ],
        out_specs=(
            pl.BlockSpec((b * n, d_model), lambda i: (0, 0)),
            pl.BlockSpec((b, NUM_HEADS, n, n), lambda i: (0, 0, 0, 0)),
        ),
        out_shape=(
            jax.ShapeDtypeStruct((b * n, d_model), x.dtype),
            jax.ShapeDtypeStruct((b, NUM_HEADS, n, n), jnp.float32),
        ),
        compiler_params=pltpu.CompilerParams(
            dimension_semantics=("arbitrary",)),
        cost_estimate=pl.CostEstimate(flops=flops,
                                      transcendentals=b * NUM_HEADS * n * n,
                                      bytes_accessed=bytes_accessed),
    )(x2, wqkv, wo, bo)

    return y2.reshape(b, n, d_model), attn


# ---------------- parameters ---------------------------------------------------
def init_params(key):
    """Canonical weights stored as (in_features, out_features), i.e. the transpose
    of torch.nn.Linear.weight, so y = x @ W (+ b). Matches the PyTorch module:
    q_proj (no bias), kv_proj (no bias), to_out Linear (with bias)."""
    k1, k2, k3, k4 = jax.random.split(key, 4)
    s_in = 1.0 / jnp.sqrt(D_MODEL)
    s_o = 1.0 / jnp.sqrt(INNER)
    return {
        "wq": jax.random.normal(k1, (D_MODEL, INNER), jnp.float32) * s_in,
        "wkv": jax.random.normal(k2, (D_MODEL, 2 * INNER), jnp.float32) * s_in,
        "wo": jax.random.normal(k3, (INNER, D_MODEL), jnp.float32) * s_o,
        "bo": jax.random.normal(k4, (D_MODEL,), jnp.float32) * s_o,
    }


def prepare_fused_params(params):
    """ONE-TIME weight transform (not per-call): fold the softmax scale into the
    wq columns and fuse q/kv projections into a single (D_MODEL, 3*INNER) matrix."""
    wqkv = jnp.concatenate([params["wq"] * SCALE, params["wkv"]], axis=1)
    return {"wqkv": wqkv, "wo": params["wo"], "bo": params["bo"]}


# ---------------- reference (plain JAX) for sanity ----------------------------
def reference_forward(x, params):
    b, n, _ = x.shape
    q = x @ params["wq"]
    kv = x @ params["wkv"]
    k, v = kv[..., :INNER], kv[..., INNER:]

    def to_heads(t):
        return t.reshape(b, n, NUM_HEADS, DIM_HEAD).transpose(0, 2, 1, 3)

    qh, kh, vh = to_heads(q), to_heads(k), to_heads(v)
    dots = jnp.einsum("bhid,bhjd->bhij", qh, kh) * SCALE
    attn = jax.nn.softmax(dots, axis=-1)
    out = jnp.einsum("bhij,bhjd->bhid", attn, vh)
    out = out.transpose(0, 2, 1, 3).reshape(b, n, INNER)
    y = out @ params["wo"] + params["bo"]
    return y, attn


if __name__ == "__main__":
    key = jax.random.PRNGKey(0)
    kx, kp = jax.random.split(key)
    x = jax.random.normal(kx, (B, N, D_MODEL), jnp.float32)
    params = init_params(kp)
    fused = prepare_fused_params(params)   # one-time transform, outside the call

    y, attn = boring_attention_forward(x, fused)
    y = jax.block_until_ready(y)
    attn = jax.block_until_ready(attn)

    y_ref, attn_ref = reference_forward(x, params)
    assert y.shape == (B, N, D_MODEL)
    assert attn.shape == (B, NUM_HEADS, N, N)
    assert jnp.allclose(attn, attn_ref, atol=1e-3, rtol=1e-3)
    assert jnp.allclose(y, y_ref, atol=1e-3, rtol=1e-3)

    print("KERNEL_OK")
</pallas_src>

<mosaic_0001>
module attributes {stable_mosaic.version = 11 : i64} {
  func.func @_fused_attention_kernel(%arg0: i32, %arg1: memref<16x32xf32, #tpu.memory_space<vmem>>, %arg2: memref<32x96xf32, #tpu.memory_space<vmem>>, %arg3: memref<32x32xf32, #tpu.memory_space<vmem>>, %arg4: memref<1x32xf32, #tpu.memory_space<vmem>>, %arg5: memref<16x32xf32, #tpu.memory_space<vmem>>, %arg6: memref<2x4x8x8xf32, #tpu.memory_space<vmem>>) attributes {dimension_semantics = [#tpu.dimension_semantics<arbitrary>], iteration_bounds = array<i64: 1>, scalar_prefetch = 0 : i64, scratch_operands = 0 : i64, tpu.core_type = #tpu.core_type<tc>, window_params = [{pipeline_mode = #tpu.pipeline_mode<synchronous>, transform_indices = @transform_0, window_bounds = array<i64: 16, 32>}, {pipeline_mode = #tpu.pipeline_mode<synchronous>, transform_indices = @transform_1, window_bounds = array<i64: 32, 96>}, {pipeline_mode = #tpu.pipeline_mode<synchronous>, transform_indices = @transform_2, window_bounds = array<i64: 32, 32>}, {pipeline_mode = #tpu.pipeline_mode<synchronous>, transform_indices = @transform_3, window_bounds = array<i64: 1, 32>}, {pipeline_mode = #tpu.pipeline_mode<synchronous>, transform_indices = @transform_4, window_bounds = array<i64: 16, 32>}, {pipeline_mode = #tpu.pipeline_mode<synchronous>, transform_indices = @transform_5, window_bounds = array<i64: 2, 4, 8, 8>}]} {
    %c0 = arith.constant 0 : index
    %c0_0 = arith.constant 0 : index
    %0 = vector.load %arg1[%c0, %c0_0] : memref<16x32xf32, #tpu.memory_space<vmem>>, vector<16x32xf32>
    %c0_1 = arith.constant 0 : index
    %c0_2 = arith.constant 0 : index
    %1 = vector.load %arg2[%c0_1, %c0_2] : memref<32x96xf32, #tpu.memory_space<vmem>>, vector<32x96xf32>
    %cst = arith.constant dense<0.000000e+00> : vector<16x96xf32>
    %2 = tpu.matmul %0, %1, %cst {dimension_numbers = #tpu.dot_dimension_numbers<[1], [0], [0], [1], [0, 0, 1, 1], [], []>} : vector<16x32xf32>, vector<32x96xf32>, vector<16x96xf32> -> vector<16x96xf32>
    %3 = vector.extract_strided_slice %2 {offsets = [0, 0], sizes = [16, 8], strides = [1, 1]} : vector<16x96xf32> to vector<16x8xf32>
    %4 = vector.shape_cast %3 : vector<16x8xf32> to vector<2x8x8xf32>
    %5 = vector.extract_strided_slice %2 {offsets = [0, 32], sizes = [16, 8], strides = [1, 1]} : vector<16x96xf32> to vector<16x8xf32>
    %6 = vector.shape_cast %5 : vector<16x8xf32> to vector<2x8x8xf32>
    %7 = vector.extract_strided_slice %2 {offsets = [0, 64], sizes = [16, 8], strides = [1, 1]} : vector<16x96xf32> to vector<16x8xf32>
    %8 = vector.shape_cast %7 : vector<16x8xf32> to vector<2x8x8xf32>
    "tpu.trace_start"() <{level = 10 : i32, message = "bid,bjd->bij"}> : () -> ()
    %cst_3 = arith.constant dense<0.000000e+00> : vector<2x8x8xf32>
    %9 = tpu.matmul %4, %6, %cst_3 {dimension_numbers = #tpu.dot_dimension_numbers<[2], [2], [1], [1], [0, 0, 0, 1, 1, 1], [0], [0]>} : vector<2x8x8xf32>, vector<2x8x8xf32>, vector<2x8x8xf32> -> vector<2x8x8xf32>
    "tpu.trace_stop"() : () -> ()
    %cst_4 = arith.constant dense<0xFF800000> : vector<2x8xf32>
    %10 = vector.multi_reduction <maximumf>, %9, %cst_4 [2] : vector<2x8x8xf32> to vector<2x8xf32>
    %11 = vector.shape_cast %10 : vector<2x8xf32> to vector<2x8x1xf32>
    %12 = vector.broadcast %11 : vector<2x8x1xf32> to vector<2x8x8xf32>
    %13 = arith.subf %9, %12 : vector<2x8x8xf32>
    %14 = math.exp %13 : vector<2x8x8xf32>
    %cst_5 = arith.constant dense<0.000000e+00> : vector<2x8xf32>
    %15 = vector.multi_reduction <add>, %14, %cst_5 [2] : vector<2x8x8xf32> to vector<2x8xf32>
    %16 = vector.shape_cast %15 : vector<2x8xf32> to vector<2x8x1xf32>
    %17 = vector.broadcast %16 : vector<2x8x1xf32> to vector<2x8x8xf32>
    %18 = arith.divf %14, %17 : vector<2x8x8xf32>
    "tpu.trace_start"() <{level = 10 : i32, message = "bij,bjd->bid"}> : () -> ()
    %cst_6 = arith.constant dense<0.000000e+00> : vector<2x8x8xf32>
    %19 = tpu.matmul %18, %8, %cst_6 {dimension_numbers = #tpu.dot_dimension_numbers<[2], [1], [1], [2], [0, 0, 0, 1, 1, 2], [0], [0]>} : vector<2x8x8xf32>, vector<2x8x8xf32>, vector<2x8x8xf32> -> vector<2x8x8xf32>
    "tpu.trace_stop"() : () -> ()
    %20 = vector.extract_strided_slice %2 {offsets = [0, 8], sizes = [16, 8], strides = [1, 1]} : vector<16x96xf32> to vector<16x8xf32>
    %21 = vector.shape_cast %20 : vector<16x8xf32> to vector<2x8x8xf32>
    %22 = vector.extract_strided_slice %2 {offsets = [0, 40], sizes = [16, 8], strides = [1, 1]} : vector<16x96xf32> to vector<16x8xf32>
    %23 = vector.shape_cast %22 : vector<16x8xf32> to vector<2x8x8xf32>
    %24 = vector.extract_strided_slice %2 {offsets = [0, 72], sizes = [16, 8], strides = [1, 1]} : vector<16x96xf32> to vector<16x8xf32>
    %25 = vector.shape_cast %24 : vector<16x8xf32> to vector<2x8x8xf32>
    "tpu.trace_start"() <{level = 10 : i32, message = "bid,bjd->bij"}> : () -> ()
    %cst_7 = arith.constant dense<0.000000e+00> : vector<2x8x8xf32>
    %26 = tpu.matmul %21, %23, %cst_7 {dimension_numbers = #tpu.dot_dimension_numbers<[2], [2], [1], [1], [0, 0, 0, 1, 1, 1], [0], [0]>} : vector<2x8x8xf32>, vector<2x8x8xf32>, vector<2x8x8xf32> -> vector<2x8x8xf32>
    "tpu.trace_stop"() : () -> ()
    %cst_8 = arith.constant dense<0xFF800000> : vector<2x8xf32>
    %27 = vector.multi_reduction <maximumf>, %26, %cst_8 [2] : vector<2x8x8xf32> to vector<2x8xf32>
    %28 = vector.shape_cast %27 : vector<2x8xf32> to vector<2x8x1xf32>
    %29 = vector.broadcast %28 : vector<2x8x1xf32> to vector<2x8x8xf32>
    %30 = arith.subf %26, %29 : vector<2x8x8xf32>
    %31 = math.exp %30 : vector<2x8x8xf32>
    %cst_9 = arith.constant dense<0.000000e+00> : vector<2x8xf32>
    %32 = vector.multi_reduction <add>, %31, %cst_9 [2] : vector<2x8x8xf32> to vector<2x8xf32>
    %33 = vector.shape_cast %32 : vector<2x8xf32> to vector<2x8x1xf32>
    %34 = vector.broadcast %33 : vector<2x8x1xf32> to vector<2x8x8xf32>
    %35 = arith.divf %31, %34 : vector<2x8x8xf32>
    "tpu.trace_start"() <{level = 10 : i32, message = "bij,bjd->bid"}> : () -> ()
    %cst_10 = arith.constant dense<0.000000e+00> : vector<2x8x8xf32>
    %36 = tpu.matmul %35, %25, %cst_10 {dimension_numbers = #tpu.dot_dimension_numbers<[2], [1], [1], [2], [0, 0, 0, 1, 1, 2], [0], [0]>} : vector<2x8x8xf32>, vector<2x8x8xf32>, vector<2x8x8xf32> -> vector<2x8x8xf32>
    "tpu.trace_stop"() : () -> ()
    %37 = vector.extract_strided_slice %2 {offsets = [0, 16], sizes = [16, 8], strides = [1, 1]} : vector<16x96xf32> to vector<16x8xf32>
    %38 = vector.shape_cast %37 : vector<16x8xf32> to vector<2x8x8xf32>
    %39 = vector.extract_strided_slice %2 {offsets = [0, 48], sizes = [16, 8], strides = [1, 1]} : vector<16x96xf32> to vector<16x8xf32>
    %40 = vector.shape_cast %39 : vector<16x8xf32> to vector<2x8x8xf32>
    %41 = vector.extract_strided_slice %2 {offsets = [0, 80], sizes = [16, 8], strides = [1, 1]} : vector<16x96xf32> to vector<16x8xf32>
    %42 = vector.shape_cast %41 : vector<16x8xf32> to vector<2x8x8xf32>
    "tpu.trace_start"() <{level = 10 : i32, message = "bid,bjd->bij"}> : () -> ()
    %cst_11 = arith.constant dense<0.000000e+00> : vector<2x8x8xf32>
    %43 = tpu.matmul %38, %40, %cst_11 {dimension_numbers = #tpu.dot_dimension_numbers<[2], [2], [1], [1], [0, 0, 0, 1, 1, 1], [0], [0]>} : vector<2x8x8xf32>, vector<2x8x8xf32>, vector<2x8x8xf32> -> vector<2x8x8xf32>
    "tpu.trace_stop"() : () -> ()
    %cst_12 = arith.constant dense<0xFF800000> : vector<2x8xf32>
    %44 = vector.multi_reduction <maximumf>, %43, %cst_12 [2] : vector<2x8x8xf32> to vector<2x8xf32>
    %45 = vector.shape_cast %44 : vector<2x8xf32> to vector<2x8x1xf32>
    %46 = vector.broadcast %45 : vector<2x8x1xf32> to vector<2x8x8xf32>
    %47 = arith.subf %43, %46 : vector<2x8x8xf32>
    %48 = math.exp %47 : vector<2x8x8xf32>
    %cst_13 = arith.constant dense<0.000000e+00> : vector<2x8xf32>
    %49 = vector.multi_reduction <add>, %48, %cst_13 [2] : vector<2x8x8xf32> to vector<2x8xf32>
    %50 = vector.shape_cast %49 : vector<2x8xf32> to vector<2x8x1xf32>
    %51 = vector.broadcast %50 : vector<2x8x1xf32> to vector<2x8x8xf32>
    %52 = arith.divf %48, %51 : vector<2x8x8xf32>
    "tpu.trace_start"() <{level = 10 : i32, message = "bij,bjd->bid"}> : () -> ()
    %cst_14 = arith.constant dense<0.000000e+00> : vector<2x8x8xf32>
    %53 = tpu.matmul %52, %42, %cst_14 {dimension_numbers = #tpu.dot_dimension_numbers<[2], [1], [1], [2], [0, 0, 0, 1, 1, 2], [0], [0]>} : vector<2x8x8xf32>, vector<2x8x8xf32>, vector<2x8x8xf32> -> vector<2x8x8xf32>
    "tpu.trace_stop"() : () -> ()
    %54 = vector.extract_strided_slice %2 {offsets = [0, 24], sizes = [16, 8], strides = [1, 1]} : vector<16x96xf32> to vector<16x8xf32>
    %55 = vector.shape_cast %54 : vector<16x8xf32> to vector<2x8x8xf32>
    %56 = vector.extract_strided_slice %2 {offsets = [0, 56], sizes = [16, 8], strides = [1, 1]} : vector<16x96xf32> to vector<16x8xf32>
    %57 = vector.shape_cast %56 : vector<16x8xf32> to vector<2x8x8xf32>
    %58 = vector.extract_strided_slice %2 {offsets = [0, 88], sizes = [16, 8], strides = [1, 1]} : vector<16x96xf32> to vector<16x8xf32>
    %59 = vector.shape_cast %58 : vector<16x8xf32> to vector<2x8x8xf32>
    "tpu.trace_start"() <{level = 10 : i32, message = "bid,bjd->bij"}> : () -> ()
    %cst_15 = arith.constant dense<0.000000e+00> : vector<2x8x8xf32>
    %60 = tpu.matmul %55, %57, %cst_15 {dimension_numbers = #tpu.dot_dimension_numbers<[2], [2], [1], [1], [0, 0, 0, 1, 1, 1], [0], [0]>} : vector<2x8x8xf32>, vector<2x8x8xf32>, vector<2x8x8xf32> -> vector<2x8x8xf32>
    "tpu.trace_stop"() : () -> ()
    %cst_16 = arith.constant dense<0xFF800000> : vector<2x8xf32>
    %61 = vector.multi_reduction <maximumf>, %60, %cst_16 [2] : vector<2x8x8xf32> to vector<2x8xf32>
    %62 = vector.shape_cast %61 : vector<2x8xf32> to vector<2x8x1xf32>
    %63 = vector.broadcast %62 : vector<2x8x1xf32> to vector<2x8x8xf32>
    %64 = arith.subf %60, %63 : vector<2x8x8xf32>
    %65 = math.exp %64 : vector<2x8x8xf32>
    %cst_17 = arith.constant dense<0.000000e+00> : vector<2x8xf32>
    %66 = vector.multi_reduction <add>, %65, %cst_17 [2] : vector<2x8x8xf32> to vector<2x8xf32>
    %67 = vector.shape_cast %66 : vector<2x8xf32> to vector<2x8x1xf32>
    %68 = vector.broadcast %67 : vector<2x8x1xf32> to vector<2x8x8xf32>
    %69 = arith.divf %65, %68 : vector<2x8x8xf32>
    "tpu.trace_start"() <{level = 10 : i32, message = "bij,bjd->bid"}> : () -> ()
    %cst_18 = arith.constant dense<0.000000e+00> : vector<2x8x8xf32>
    %70 = tpu.matmul %69, %59, %cst_18 {dimension_numbers = #tpu.dot_dimension_numbers<[2], [1], [1], [2], [0, 0, 0, 1, 1, 2], [0], [0]>} : vector<2x8x8xf32>, vector<2x8x8xf32>, vector<2x8x8xf32> -> vector<2x8x8xf32>
    "tpu.trace_stop"() : () -> ()
    %71 = vector.shape_cast %18 : vector<2x8x8xf32> to vector<2x1x8x8xf32>
    %72 = vector.shape_cast %35 : vector<2x8x8xf32> to vector<2x1x8x8xf32>
    %73 = vector.shape_cast %52 : vector<2x8x8xf32> to vector<2x1x8x8xf32>
    %74 = vector.shape_cast %69 : vector<2x8x8xf32> to vector<2x1x8x8xf32>
    %75 = tpu.concatenate %71, %72, %73, %74 in 1 : vector<2x1x8x8xf32>, vector<2x1x8x8xf32>, vector<2x1x8x8xf32>, vector<2x1x8x8xf32> -> vector<2x4x8x8xf32>
    %c0_19 = arith.constant 0 : index
    %c0_20 = arith.constant 0 : index
    %c0_21 = arith.constant 0 : index
    %c0_22 = arith.constant 0 : index
    %76 = vector.load %arg6[%c0_19, %c0_20, %c0_21, %c0_22] : memref<2x4x8x8xf32, #tpu.memory_space<vmem>>, vector<2x4x8x8xf32>
    tpu.vector_store %arg6[%c0_19, %c0_20, %c0_21, %c0_22], %75 {strides = array<i32>} : memref<2x4x8x8xf32, #tpu.memory_space<vmem>>, vector<2x4x8x8xf32>,
    %77 = tpu.concatenate %19, %36, %53, %70 in 2 : vector<2x8x8xf32>, vector<2x8x8xf32>, vector<2x8x8xf32>, vector<2x8x8xf32> -> vector<2x8x32xf32>
    %78 = vector.shape_cast %77 : vector<2x8x32xf32> to vector<16x32xf32>
    %c0_23 = arith.constant 0 : index
    %c0_24 = arith.constant 0 : index
    %79 = vector.load %arg3[%c0_23, %c0_24] : memref<32x32xf32, #tpu.memory_space<vmem>>, vector<32x32xf32>
    %cst_25 = arith.constant dense<0.000000e+00> : vector<16x32xf32>
    %80 = tpu.matmul %78, %79, %cst_25 {dimension_numbers = #tpu.dot_dimension_numbers<[1], [0], [0], [1], [0, 0, 1, 1], [], []>} : vector<16x32xf32>, vector<32x32xf32>, vector<16x32xf32> -> vector<16x32xf32>
    %c0_26 = arith.constant 0 : index
    %c0_27 = arith.constant 0 : index
    %81 = vector.load %arg4[%c0_26, %c0_27] : memref<1x32xf32, #tpu.memory_space<vmem>>, vector<1x32xf32>
    %82 = vector.broadcast %81 : vector<1x32xf32> to vector<16x32xf32>
    %83 = arith.addf %80, %82 : vector<16x32xf32>
    %c0_28 = arith.constant 0 : index
    %c0_29 = arith.constant 0 : index
    %84 = vector.load %arg5[%c0_28, %c0_29] : memref<16x32xf32, #tpu.memory_space<vmem>>, vector<16x32xf32>
    tpu.vector_store %arg5[%c0_28, %c0_29], %83 {strides = array<i32>} : memref<16x32xf32, #tpu.memory_space<vmem>>, vector<16x32xf32>,
    return
  }
  func.func @transform_0(%arg0: i32) -> (i32, i32) {
    %c0_i32 = arith.constant 0 : i32
    %c0_i32_0 = arith.constant 0 : i32
    %c0_i32_1 = arith.constant 0 : i32
    return %c0_i32, %c0_i32_0 : i32, i32
  }
  func.func @transform_1(%arg0: i32) -> (i32, i32) {
    %c0_i32 = arith.constant 0 : i32
    %c0_i32_0 = arith.constant 0 : i32
    %c0_i32_1 = arith.constant 0 : i32
    return %c0_i32, %c0_i32_0 : i32, i32
  }
  func.func @transform_2(%arg0: i32) -> (i32, i32) {
    %c0_i32 = arith.constant 0 : i32
    %c0_i32_0 = arith.constant 0 : i32
    %c0_i32_1 = arith.constant 0 : i32
    return %c0_i32, %c0_i32_0 : i32, i32
  }
  func.func @transform_3(%arg0: i32) -> (i32, i32) {
    %c0_i32 = arith.constant 0 : i32
    %c0_i32_0 = arith.constant 0 : i32
    %c0_i32_1 = arith.constant 0 : i32
    return %c0_i32, %c0_i32_0 : i32, i32
  }
  func.func @transform_4(%arg0: i32) -> (i32, i32) {
    %c0_i32 = arith.constant 0 : i32
    %c0_i32_0 = arith.constant 0 : i32
    %c0_i32_1 = arith.constant 0 : i32
    return %c0_i32, %c0_i32_0 : i32, i32
  }
  func.func @transform_5(%arg0: i32) -> (i32, i32, i32, i32) {
    %c0_i32 = arith.constant 0 : i32
    %c0_i32_0 = arith.constant 0 : i32
    %c0_i32_1 = arith.constant 0 : i32
    %c0_i32_2 = arith.constant 0 : i32
    %c0_i32_3 = arith.constant 0 : i32
    return %c0_i32, %c0_i32_0, %c0_i32_1, %c0_i32_2 : i32, i32, i32, i32
  }
}

</mosaic_0001>

<llo_original>
// kernel: boring_attention_forward.1
$region0: #{boring_attention_forward.1}
  #allocation0 [shape = 'u32[]', space=smem, size = 0x4, offset = 0x4, fixed_abs, tag = 'smem constant byte address 0x4 - core index']
  #allocation1 [shape = 'u32[144,128]{1,0:T(1,128)}', space=vmem, size = 0x12000, scoped, tag = 'internal scratch']
  %s0 = inlined_call_operand.hbm [shape: f32[16,32], index: 0, kind: input, shape index: {}]
  %s1 = inlined_call_operand.hbm [shape: f32[32,96], index: 1, kind: input, shape index: {}]
  %s2 = inlined_call_operand.hbm [shape: f32[32,32], index: 2, kind: input, shape index: {}]
  %s3 = inlined_call_operand.vmem [shape: f32[1,32], index: 3, kind: input, shape index: {}]
  %s4 = inlined_call_operand.hbm [shape: f32[16,32], index: 4, kind: output, shape index: {0}]
  %s5 = inlined_call_operand.hbm [shape: f32[2,4,8,8], index: 5, kind: output, shape index: {1}]
  %6 = xla_tuple %s4, %s5
  %s7 = sld [smem:[#allocation0]]
  $region46: #{boring_attention_forward.1} parent=0
    _
  %s9 = ssub.s32 1, %s7
  %s10 = scalar_select 0, %s9, %s7
  $region1: #{boring_attention_forward.1} parent=0
    #allocation2 [shape = 'u8[8192]{0}', space=vmem, size = 0x2000, scoped, tag = 'input window, operand 0, single buffered']
    #allocation3 [shape = 's32[1]{0}', space=sflag, size = 0x4, scoped, tag = 'scoped memory for boring_attention_forward.1']
    #allocation4 [shape = 's32[1]{0}', space=sflag, size = 0x4, scoped, tag = 'scoped memory for boring_attention_forward.1']
    #allocation5 [shape = 'u8[16384]{0}', space=vmem, size = 0x4000, scoped, tag = 'input window, operand 1, single buffered']
    #allocation6 [shape = 's32[1]{0}', space=sflag, size = 0x4, scoped, tag = 'scoped memory for boring_attention_forward.1']
    #allocation7 [shape = 'u8[16384]{0}', space=vmem, size = 0x4000, scoped, tag = 'input window, operand 2, single buffered']
    #allocation8 [shape = 'u8[8192]{0}', space=vmem, size = 0x2000, scoped, tag = 'output window, operand 0, single buffered']
    #allocation9 [shape = 'u8[32768]{0}', space=vmem, size = 0x8000, scoped, tag = 'output window, operand 1, single buffered']
    #allocation10 [shape = 's32[1]{0}', space=sflag, size = 0x4, scoped, tag = 'scoped memory for boring_attention_forward.1']
    %11 = vsyncpa [#allocation3], 0
    %12 = vsyncpa [#allocation6], 0
    %13 = vsyncpa [#allocation4], 0
    %14 = vsyncpa [#allocation10], 0
    // Predicated region
    $region2: #{boring_attention_forward.1} parent=1 // pred_check
      _
    $region3: #{boring_attention_forward.1} parent=1 // pred_check_branch
      %16 = sbr.rel (0) target = $region5
    $region4: #{boring_attention_forward.1} parent=1 // pred_region
      %s18 = ssub.s32 256, 256
      %19 = vsyncadd [#allocation3], %s18
      %s20 = sshll.u32 [#allocation2], 4
      %s21 = int_to_ptr.vmem [resolvable:$true] %s20
      %26 = dma.hbm_to_vmem [thread:$0]  %s0, 256, %s21, [#allocation3], 128, 128, 8
    $region5: #{boring_attention_forward.1} parent=1 // pred_fallthru
      _
    // Predicated region
    $region6: #{boring_attention_forward.1} parent=1 // pred_check
      _
    $region7: #{boring_attention_forward.1} parent=1 // pred_check_branch
      %28 = sbr.rel (0) target = $region9
    $region8: #{boring_attention_forward.1} parent=1 // pred_region
      %s30 = ssub.s32 512, 512
      %31 = vsyncadd [#allocation6], %s30
      %s32 = sshll.u32 [#allocation5], 4
      %s33 = int_to_ptr.vmem [resolvable:$true] %s32
      %38 = dma.hbm_to_vmem [thread:$0]  %s1, 512, %s33, [#allocation6], 128, 128, 8
    $region9: #{boring_attention_forward.1} parent=1 // pred_fallthru
      _
    // Predicated region
    $region10: #{boring_attention_forward.1} parent=1 // pred_check
      _
    $region11: #{boring_attention_forward.1} parent=1 // pred_check_branch
      %40 = sbr.rel (0) target = $region13
    $region12: #{boring_attention_forward.1} parent=1 // pred_region
      %s42 = ssub.s32 512, 512
      %43 = vsyncadd [#allocation6], %s42
      %s44 = sshll.u32 [#allocation7], 4
      %s45 = int_to_ptr.vmem [resolvable:$true] %s44
      %50 = dma.hbm_to_vmem [thread:$0]  %s2, 512, %s45, [#allocation6], 128, 128, 8
    $region13: #{boring_attention_forward.1} parent=1 // pred_fallthru
      _
    // Predicated region
    $region14: #{boring_attention_forward.1} parent=1 // pred_check
      _
    $region15: #{boring_attention_forward.1} parent=1 // pred_check_branch
      %52 = sbr.rel (0) target = $region17
    $region16: #{boring_attention_forward.1} parent=1 // pred_region
      _
    $region17: #{boring_attention_forward.1} parent=1 // pred_fallthru
      _
    // Predicated region
    $region18: #{boring_attention_forward.1} parent=1 // pred_check
      _
    $region19: #{boring_attention_forward.1} parent=1 // pred_check_branch
      %54 = sbr.rel (0) target = $region21
    $region20: #{boring_attention_forward.1} parent=1 // pred_region
      %55 = dma.done [#allocation3], 256
    $region21: #{boring_attention_forward.1} parent=1 // pred_fallthru
      _
    // Predicated region
    $region22: #{boring_attention_forward.1} parent=1 // pred_check
      _
    $region23: #{boring_attention_forward.1} parent=1 // pred_check_branch
      %57 = sbr.rel (0) target = $region25
    $region24: #{boring_attention_forward.1} parent=1 // pred_region
      %58 = dma.done [#allocation6], 512
    $region25: #{boring_attention_forward.1} parent=1 // pred_fallthru
      _
    // Predicated region
    $region26: #{boring_attention_forward.1} parent=1 // pred_check
      _
    $region27: #{boring_attention_forward.1} parent=1 // pred_check_branch
      %60 = sbr.rel (0) target = $region29
    $region28: #{boring_attention_forward.1} parent=1 // pred_region
      %61 = dma.done [#allocation6], 512
    $region29: #{boring_attention_forward.1} parent=1 // pred_fallthru
      _
    %v62 = vld [vmem:[#allocation2] sm:$0xff]
    %v63 = vld [vmem:[#allocation2 + $0x8] sm:$0xff]
    %v64 = vld [vmem:[#allocation5] sm:$0xff]
    %v65 = vld [vmem:[#allocation5 + $0x8] sm:$0xff]
    %v66 = vld [vmem:[#allocation5 + $0x10] sm:$0xff]
    %v67 = vld [vmem:[#allocation5 + $0x18] sm:$0xff]
    %vm68 = vcmask 261120
    %v70 = vsel %vm68, %v62, 0
    %v73 = vsel %vm68, %v63, 0
    %75 = vmatprep.subr.mxu0 0.0
    %76 = vmatpush1.msra.mxu0 %v64
    %77 = vmatprep.subr.mxu0 0.0
    %78 = vmatpush1.msra.mxu0 %v65
    %79 = vmatprep.subr.mxu0 0.0
    %80 = vmatpush1.msra.mxu0 %v66
    %81 = vmatprep.subr.mxu0 0.0
    %82 = vmatpush1.msra.mxu0 %v67
    %83 = vmatprep.subr.mxu0 0.0
    %84 = vmatpush1.msra.mxu0 0.0
    %85 = vmatprep.subr.mxu0 0.0
    %86 = vmatpush1.msra.mxu0 0.0
    %87 = vmatprep.subr.mxu0 0.0
    %88 = vmatpush1.msra.mxu0 0.0
    %89 = vmatprep.subr.mxu0 0.0
    %90 = vmatpush1.msra.mxu0 0.0
    %91 = vmatprep.subr.mxu0 0.0
    %92 = vmatpush1.msra.mxu0 0.0
    %93 = vmatprep.subr.mxu0 0.0
    %94 = vmatpush1.msra.mxu0 0.0
    %95 = vmatprep.subr.mxu0 0.0
    %96 = vmatpush1.msra.mxu0 0.0
    %97 = vmatprep.subr.mxu0 0.0
    %98 = vmatpush1.msra.mxu0 0.0
    %99 = vmatprep.subr.mxu0 0.0
    %100 = vmatpush1.msra.mxu0 0.0
    %101 = vmatprep.subr.mxu0 0.0
    %102 = vmatpush1.msra.mxu0 0.0
    %103 = vmatprep.subr.mxu0 0.0
    %104 = vmatpush1.msra.mxu0 0.0
    %105 = vmatprep.subr.mxu0 0.0
    %106 = vmatpush1.msra.mxu0 0.0
    %107 = vmatprep.subr.mxu0 0.0
    %108 = vmatpush1.msra.mxu0 0.0
    %109 = vmatprep.subr.mxu0 0.0
    %110 = vmatpush1.msra.mxu0 0.0
    %111 = vmatprep.subr.mxu0 0.0
    %112 = vmatpush1.msra.mxu0 0.0
    %113 = vmatprep.subr.mxu0 0.0
    %114 = vmatpush1.msra.mxu0 0.0
    %115 = vmatprep.subr.mxu0 0.0
    %116 = vmatpush1.msra.mxu0 0.0
    %117 = vmatprep.subr.mxu0 0.0
    %118 = vmatpush1.msra.mxu0 0.0
    %119 = vmatprep.subr.mxu0 0.0
    %120 = vmatpush1.msra.mxu0 0.0
    %121 = vmatprep.subr.mxu0 0.0
    %122 = vmatpush1.msra.mxu0 0.0
    %123 = vmatprep.subr.mxu0 0.0
    %124 = vmatpush1.msra.mxu0 0.0
    %125 = vmatprep.subr.mxu0 0.0
    %126 = vmatpush1.msra.mxu0 0.0
    %127 = vmatprep.subr.mxu0 0.0
    %128 = vmatpush1.msra.mxu0 0.0
    %129 = vmatprep.subr.mxu0 0.0
    %130 = vmatpush1.msra.mxu0 0.0
    %131 = vmatprep.subr.mxu0 0.0
    %132 = vmatpush1.msra.mxu0 0.0
    %133 = vmatprep.subr.mxu0 0.0
    %134 = vmatpush1.msra.mxu0 0.0
    %135 = vmatprep.subr.mxu0 0.0
    %136 = vmatpush1.msra.mxu0 0.0
    %137 = vmatprep.subr.mxu0 0.0
    %138 = vmatpush1.msra.mxu0 0.0
    %139 = vmatprep.mubr.f32.mxu0 0.0
    %140 = vmatmul.mubr.f32.gmra.mrb[0].mxu0 %v70
    %v141 = vpop.f32.mrb[0].mxu0
    %v142 = vadd.f32 0.0, %v141
    %v143 = vpop.f32.mrb[0].mxu0
    %144 = vmatprep.mubr.f32.mxu0 0.0
    %145 = vmatmul.mubr.f32.gmra.mrb[0].mxu0 %v73
    %v146 = vpop.f32.mrb[0].mxu0
    %v147 = vadd.f32 0.0, %v146
    %v148 = vpop.f32.mrb[0].mxu0
    %149 = vdwg.mxu0
    %151 = vrot.lane.b32.xlu0 %v142, 96
    %v152 = vpop.permute.xlu0 %151
    %vm153 = vcmask 64512
    %v154 = vsel %vm153, %v142, 0
    %v156 = vsel %vm153, %v152, 0
    %158 = vmatprep.subr.mxu0 0.0
    %159 = vmatpush1.xpose.msra.mxu0 %v156
    %160 = vmatprep.subr.mxu0 0.0
    %161 = vmatpush1.xpose.msra.mxu0 0.0
    %162 = vmatprep.subr.mxu0 0.0
    %163 = vmatpush1.xpose.msra.mxu0 0.0
    %164 = vmatprep.subr.mxu0 0.0
    %165 = vmatpush1.xpose.msra.mxu0 0.0
    %166 = vmatprep.subr.mxu0 0.0
    %167 = vmatpush1.xpose.msra.mxu0 0.0
    %168 = vmatprep.subr.mxu0 0.0
    %169 = vmatpush1.xpose.msra.mxu0 0.0
    %170 = vmatprep.subr.mxu0 0.0
    %171 = vmatpush1.xpose.msra.mxu0 0.0
    %172 = vmatprep.subr.mxu0 0.0
    %173 = vmatpush1.xpose.msra.mxu0 0.0
    %174 = vmatprep.subr.mxu0 0.0
    %175 = vmatpush1.xpose.msra.mxu0 0.0
    %176 = vmatprep.subr.mxu0 0.0
    %177 = vmatpush1.xpose.msra.mxu0 0.0
    %178 = vmatprep.subr.mxu0 0.0
    %179 = vmatpush1.xpose.msra.mxu0 0.0
    %180 = vmatprep.subr.mxu0 0.0
    %181 = vmatpush1.xpose.msra.mxu0 0.0
    %182 = vmatprep.subr.mxu0 0.0
    %183 = vmatpush1.xpose.msra.mxu0 0.0
    %184 = vmatprep.subr.mxu0 0.0
    %185 = vmatpush1.xpose.msra.mxu0 0.0
    %186 = vmatprep.subr.mxu0 0.0
    %187 = vmatpush1.xpose.msra.mxu0 0.0
    %188 = vmatprep.subr.mxu0 0.0
    %189 = vmatpush1.xpose.msra.mxu0 0.0
    %190 = vmatprep.subr.mxu0 0.0
    %191 = vmatpush1.xpose.msra.mxu0 0.0
    %192 = vmatprep.subr.mxu0 0.0
    %193 = vmatpush1.xpose.msra.mxu0 0.0
    %194 = vmatprep.subr.mxu0 0.0
    %195 = vmatpush1.xpose.msra.mxu0 0.0
    %196 = vmatprep.subr.mxu0 0.0
    %197 = vmatpush1.xpose.msra.mxu0 0.0
    %198 = vmatprep.subr.mxu0 0.0
    %199 = vmatpush1.xpose.msra.mxu0 0.0
    %200 = vmatprep.subr.mxu0 0.0
    %201 = vmatpush1.xpose.msra.mxu0 0.0
    %202 = vmatprep.subr.mxu0 0.0
    %203 = vmatpush1.xpose.msra.mxu0 0.0
    %204 = vmatprep.subr.mxu0 0.0
    %205 = vmatpush1.xpose.msra.mxu0 0.0
    %206 = vmatprep.subr.mxu0 0.0
    %207 = vmatpush1.xpose.msra.mxu0 0.0
    %208 = vmatprep.subr.mxu0 0.0
    %209 = vmatpush1.xpose.msra.mxu0 0.0
    %210 = vmatprep.subr.mxu0 0.0
    %211 = vmatpush1.xpose.msra.mxu0 0.0
    %212 = vmatprep.subr.mxu0 0.0
    %213 = vmatpush1.xpose.msra.mxu0 0.0
    %214 = vmatprep.subr.mxu0 0.0
    %215 = vmatpush1.xpose.msra.mxu0 0.0
    %216 = vmatprep.subr.mxu0 0.0
    %217 = vmatpush1.xpose.msra.mxu0 0.0
    %218 = vmatprep.subr.mxu0 0.0
    %219 = vmatpush1.xpose.msra.mxu0 0.0
    %220 = vmatprep.subr.mxu0 0.0
    %221 = vmatpush1.xpose.msra.mxu0 0.0
    %222 = vmatprep.mubr.f32.mxu0 0.0
    %223 = vmatmul.mubr.f32.gmra.mrb[0].mxu0 %v154
    %v224 = vpop.f32.mrb[0].mxu0
    %v225 = vadd.f32 0.0, %v224
    %v226 = vpop.f32.mrb[0].mxu0
    %227 = vdwg.mxu0
    %229 = vrot.lane.b32.xlu0 %v147, 96
    %v230 = vpop.permute.xlu0 %229
    %v231 = vsel %vm153, %v147, 0
    %v233 = vsel %vm153, %v230, 0
    %235 = vmatprep.subr.mxu0 0.0
    %236 = vmatpush1.xpose.msra.mxu0 %v233
    %237 = vmatprep.subr.mxu0 0.0
    %238 = vmatpush1.xpose.msra.mxu0 0.0
    %239 = vmatprep.subr.mxu0 0.0
    %240 = vmatpush1.xpose.msra.mxu0 0.0
    %241 = vmatprep.subr.mxu0 0.0
    %242 = vmatpush1.xpose.msra.mxu0 0.0
    %243 = vmatprep.subr.mxu0 0.0
    %244 = vmatpush1.xpose.msra.mxu0 0.0
    %245 = vmatprep.subr.mxu0 0.0
    %246 = vmatpush1.xpose.msra.mxu0 0.0
    %247 = vmatprep.subr.mxu0 0.0
    %248 = vmatpush1.xpose.msra.mxu0 0.0
    %249 = vmatprep.subr.mxu0 0.0
    %250 = vmatpush1.xpose.msra.mxu0 0.0
    %251 = vmatprep.subr.mxu0 0.0
    %252 = vmatpush1.xpose.msra.mxu0 0.0
    %253 = vmatprep.subr.mxu0 0.0
    %254 = vmatpush1.xpose.msra.mxu0 0.0
    %255 = vmatprep.subr.mxu0 0.0
    %256 = vmatpush1.xpose.msra.mxu0 0.0
    %257 = vmatprep.subr.mxu0 0.0
    %258 = vmatpush1.xpose.msra.mxu0 0.0
    %259 = vmatprep.subr.mxu0 0.0
    %260 = vmatpush1.xpose.msra.mxu0 0.0
    %261 = vmatprep.subr.mxu0 0.0
    %262 = vmatpush1.xpose.msra.mxu0 0.0
    %263 = vmatprep.subr.mxu0 0.0
    %264 = vmatpush1.xpose.msra.mxu0 0.0
    %265 = vmatprep.subr.mxu0 0.0
    %266 = vmatpush1.xpose.msra.mxu0 0.0
    %267 = vmatprep.subr.mxu0 0.0
    %268 = vmatpush1.xpose.msra.mxu0 0.0
    %269 = vmatprep.subr.mxu0 0.0
    %270 = vmatpush1.xpose.msra.mxu0 0.0
    %271 = vmatprep.subr.mxu0 0.0
    %272 = vmatpush1.xpose.msra.mxu0 0.0
    %273 = vmatprep.subr.mxu0 0.0
    %274 = vmatpush1.xpose.msra.mxu0 0.0
    %275 = vmatprep.subr.mxu0 0.0
    %276 = vmatpush1.xpose.msra.mxu0 0.0
    %277 = vmatprep.subr.mxu0 0.0
    %278 = vmatpush1.xpose.msra.mxu0 0.0
    %279 = vmatprep.subr.mxu0 0.0
    %280 = vmatpush1.xpose.msra.mxu0 0.0
    %281 = vmatprep.subr.mxu0 0.0
    %282 = vmatpush1.xpose.msra.mxu0 0.0
    %283 = vmatprep.subr.mxu0 0.0
    %284 = vmatpush1.xpose.msra.mxu0 0.0
    %285 = vmatprep.subr.mxu0 0.0
    %286 = vmatpush1.xpose.msra.mxu0 0.0
    %287 = vmatprep.subr.mxu0 0.0
    %288 = vmatpush1.xpose.msra.mxu0 0.0
    %289 = vmatprep.subr.mxu0 0.0
    %290 = vmatpush1.xpose.msra.mxu0 0.0
    %291 = vmatprep.subr.mxu0 0.0
    %292 = vmatpush1.xpose.msra.mxu0 0.0
    %293 = vmatprep.subr.mxu0 0.0
    %294 = vmatpush1.xpose.msra.mxu0 0.0
    %295 = vmatprep.subr.mxu0 0.0
    %296 = vmatpush1.xpose.msra.mxu0 0.0
    %297 = vmatprep.subr.mxu0 0.0
    %298 = vmatpush1.xpose.msra.mxu0 0.0
    %299 = vmatprep.mubr.f32.mxu0 0.0
    %300 = vmatmul.mubr.f32.gmra.mrb[0].mxu0 %v231
    %v301 = vpop.f32.mrb[0].mxu0
    %v302 = vadd.f32 0.0, %v301
    %v303 = vpop.f32.mrb[0].mxu0
    %304 = vdwg.mxu0
    %v305 = vsel %vm153, %v225, -inf
    %306 = vmax.xlane.f32.xlu0 %v305
    %v307 = vpop.xlane.xlu0 %306
    %v308 = vsel %vm153, %v302, -inf
    %309 = vmax.xlane.f32.xlu0 %v308
    %v310 = vpop.xlane.xlu0 %309
    %v311 = vsub.f32 %v225, %v307
    %v312 = vsub.f32 %v302, %v310
    %v313 = vmul.f32 %v311, 1.442695
    %v314 = vpow.pop %v313
    %v315 = vmul.f32 %v312, 1.442695
    %v316 = vpow.pop %v315
    %v317 = vsel %vm153, %v314, 0.0
    %318 = vadd.xlane.f32.xlu0 %v317
    %v319 = vpop.xlane.xlu0 %318
    %v320 = vsel %vm153, %v316, 0.0
    %321 = vadd.xlane.f32.xlu0 %v320
    %v322 = vpop.xlane.xlu0 %321
    %v323 = vrcp.pop %v319
    %v324 = vmul.f32 %v314, %v323
    %v325 = vrcp.pop %v322
    %v326 = vmul.f32 %v316, %v325
    %327 = vrot.lane.b32.xlu0 %v142, 64
    %v328 = vpop.permute.xlu0 %327
    %v331 = vsel %vm153, %v324, 0
    %333 = vmatprep.subr.mxu0 0.0
    %334 = vmatpush1.msra.mxu0 %v328
    %335 = vmatprep.subr.mxu0 0.0
    %336 = vmatpush1.msra.mxu0 0.0
    %337 = vmatprep.subr.mxu0 0.0
    %338 = vmatpush1.msra.mxu0 0.0
    %339 = vmatprep.subr.mxu0 0.0
    %340 = vmatpush1.msra.mxu0 0.0
    %341 = vmatprep.subr.mxu0 0.0
    %342 = vmatpush1.msra.mxu0 0.0
    %343 = vmatprep.subr.mxu0 0.0
    %344 = vmatpush1.msra.mxu0 0.0
    %345 = vmatprep.subr.mxu0 0.0
    %346 = vmatpush1.msra.mxu0 0.0
    %347 = vmatprep.subr.mxu0 0.0
    %348 = vmatpush1.msra.mxu0 0.0
    %349 = vmatprep.subr.mxu0 0.0
    %350 = vmatpush1.msra.mxu0 0.0
    %351 = vmatprep.subr.mxu0 0.0
    %352 = vmatpush1.msra.mxu0 0.0
    %353 = vmatprep.subr.mxu0 0.0
    %354 = vmatpush1.msra.mxu0 0.0
    %355 = vmatprep.subr.mxu0 0.0
    %356 = vmatpush1.msra.mxu0 0.0
    %357 = vmatprep.subr.mxu0 0.0
    %358 = vmatpush1.msra.mxu0 0.0
    %359 = vmatprep.subr.mxu0 0.0
    %360 = vmatpush1.msra.mxu0 0.0
    %361 = vmatprep.subr.mxu0 0.0
    %362 = vmatpush1.msra.mxu0 0.0
    %363 = vmatprep.subr.mxu0 0.0
    %364 = vmatpush1.msra.mxu0 0.0
    %365 = vmatprep.subr.mxu0 0.0
    %366 = vmatpush1.msra.mxu0 0.0
    %367 = vmatprep.subr.mxu0 0.0
    %368 = vmatpush1.msra.mxu0 0.0
    %369 = vmatprep.subr.mxu0 0.0
    %370 = vmatpush1.msra.mxu0 0.0
    %371 = vmatprep.subr.mxu0 0.0
    %372 = vmatpush1.msra.mxu0 0.0
    %373 = vmatprep.subr.mxu0 0.0
    %374 = vmatpush1.msra.mxu0 0.0
    %375 = vmatprep.subr.mxu0 0.0
    %376 = vmatpush1.msra.mxu0 0.0
    %377 = vmatprep.subr.mxu0 0.0
    %378 = vmatpush1.msra.mxu0 0.0
    %379 = vmatprep.subr.mxu0 0.0
    %380 = vmatpush1.msra.mxu0 0.0
    %381 = vmatprep.subr.mxu0 0.0
    %382 = vmatpush1.msra.mxu0 0.0
    %383 = vmatprep.subr.mxu0 0.0
    %384 = vmatpush1.msra.mxu0 0.0
    %385 = vmatprep.subr.mxu0 0.0
    %386 = vmatpush1.msra.mxu0 0.0
    %387 = vmatprep.subr.mxu0 0.0
    %388 = vmatpush1.msra.mxu0 0.0
    %389 = vmatprep.subr.mxu0 0.0
    %390 = vmatpush1.msra.mxu0 0.0
    %391 = vmatprep.subr.mxu0 0.0
    %392 = vmatpush1.msra.mxu0 0.0
    %393 = vmatprep.subr.mxu0 0.0
    %394 = vmatpush1.msra.mxu0 0.0
    %395 = vmatprep.subr.mxu0 0.0
    %396 = vmatpush1.msra.mxu0 0.0
    %397 = vmatprep.mubr.f32.mxu0 0.0
    %398 = vmatmul.mubr.f32.gmra.mrb[0].mxu0 %v331
    %v399 = vpop.f32.mrb[0].mxu0
    %v400 = vadd.f32 0.0, %v399
    %v401 = vpop.f32.mrb[0].mxu0
    %402 = vdwg.mxu0
    %403 = vrot.lane.b32.xlu0 %v147, 64
    %v404 = vpop.permute.xlu0 %403
    %v407 = vsel %vm153, %v326, 0
    %409 = vmatprep.subr.mxu0 0.0
    %410 = vmatpush1.msra.mxu0 %v404
    %411 = vmatprep.subr.mxu0 0.0
    %412 = vmatpush1.msra.mxu0 0.0
    %413 = vmatprep.subr.mxu0 0.0
    %414 = vmatpush1.msra.mxu0 0.0
    %415 = vmatprep.subr.mxu0 0.0
    %416 = vmatpush1.msra.mxu0 0.0
    %417 = vmatprep.subr.mxu0 0.0
    %418 = vmatpush1.msra.mxu0 0.0
    %419 = vmatprep.subr.mxu0 0.0
    %420 = vmatpush1.msra.mxu0 0.0
    %421 = vmatprep.subr.mxu0 0.0
    %422 = vmatpush1.msra.mxu0 0.0
    %423 = vmatprep.subr.mxu0 0.0
    %424 = vmatpush1.msra.mxu0 0.0
    %425 = vmatprep.subr.mxu0 0.0
    %426 = vmatpush1.msra.mxu0 0.0
    %427 = vmatprep.subr.mxu0 0.0
    %428 = vmatpush1.msra.mxu0 0.0
    %429 = vmatprep.subr.mxu0 0.0
    %430 = vmatpush1.msra.mxu0 0.0
    %431 = vmatprep.subr.mxu0 0.0
    %432 = vmatpush1.msra.mxu0 0.0
    %433 = vmatprep.subr.mxu0 0.0
    %434 = vmatpush1.msra.mxu0 0.0
    %435 = vmatprep.subr.mxu0 0.0
    %436 = vmatpush1.msra.mxu0 0.0
    %437 = vmatprep.subr.mxu0 0.0
    %438 = vmatpush1.msra.mxu0 0.0
    %439 = vmatprep.subr.mxu0 0.0
    %440 = vmatpush1.msra.mxu0 0.0
    %441 = vmatprep.subr.mxu0 0.0
    %442 = vmatpush1.msra.mxu0 0.0
    %443 = vmatprep.subr.mxu0 0.0
    %444 = vmatpush1.msra.mxu0 0.0
    %445 = vmatprep.subr.mxu0 0.0
    %446 = vmatpush1.msra.mxu0 0.0
    %447 = vmatprep.subr.mxu0 0.0
    %448 = vmatpush1.msra.mxu0 0.0
    %449 = vmatprep.subr.mxu0 0.0
    %450 = vmatpush1.msra.mxu0 0.0
    %451 = vmatprep.subr.mxu0 0.0
    %452 = vmatpush1.msra.mxu0 0.0
    %453 = vmatprep.subr.mxu0 0.0
    %454 = vmatpush1.msra.mxu0 0.0
    %455 = vmatprep.subr.mxu0 0.0
    %456 = vmatpush1.msra.mxu0 0.0
    %457 = vmatprep.subr.mxu0 0.0
    %458 = vmatpush1.msra.mxu0 0.0
    %459 = vmatprep.subr.mxu0 0.0
    %460 = vmatpush1.msra.mxu0 0.0
    %461 = vmatprep.subr.mxu0 0.0
    %462 = vmatpush1.msra.mxu0 0.0
    %463 = vmatprep.subr.mxu0 0.0
    %464 = vmatpush1.msra.mxu0 0.0
    %465 = vmatprep.subr.mxu0 0.0
    %466 = vmatpush1.msra.mxu0 0.0
    %467 = vmatprep.subr.mxu0 0.0
    %468 = vmatpush1.msra.mxu0 0.0
    %469 = vmatprep.subr.mxu0 0.0
    %470 = vmatpush1.msra.mxu0 0.0
    %471 = vmatprep.subr.mxu0 0.0
    %472 = vmatpush1.msra.mxu0 0.0
    %473 = vmatprep.mubr.f32.mxu0 0.0
    %474 = vmatmul.mubr.f32.gmra.mrb[0].mxu0 %v407
    %v475 = vpop.f32.mrb[0].mxu0
    %v476 = vadd.f32 0.0, %v475
    %v477 = vpop.f32.mrb[0].mxu0
    %478 = vdwg.mxu0
    %479 = vrot.lane.b32.xlu0 %v142, 120
    %v480 = vpop.permute.xlu0 %479
    %481 = vrot.lane.b32.xlu0 %v142, 88
    %v482 = vpop.permute.xlu0 %481
    %v483 = vsel %vm153, %v480, 0
    %v485 = vsel %vm153, %v482, 0
    %487 = vmatprep.subr.mxu0 0.0
    %488 = vmatpush1.xpose.msra.mxu0 %v485
    %489 = vmatprep.subr.mxu0 0.0
    %490 = vmatpush1.xpose.msra.mxu0 0.0
    %491 = vmatprep.subr.mxu0 0.0
    %492 = vmatpush1.xpose.msra.mxu0 0.0
    %493 = vmatprep.subr.mxu0 0.0
    %494 = vmatpush1.xpose.msra.mxu0 0.0
    %495 = vmatprep.subr.mxu0 0.0
    %496 = vmatpush1.xpose.msra.mxu0 0.0
    %497 = vmatprep.subr.mxu0 0.0
    %498 = vmatpush1.xpose.msra.mxu0 0.0
    %499 = vmatprep.subr.mxu0 0.0
    %500 = vmatpush1.xpose.msra.mxu0 0.0
    %501 = vmatprep.subr.mxu0 0.0
    %502 = vmatpush1.xpose.msra.mxu0 0.0
    %503 = vmatprep.subr.mxu0 0.0
    %504 = vmatpush1.xpose.msra.mxu0 0.0
    %505 = vmatprep.subr.mxu0 0.0
    %506 = vmatpush1.xpose.msra.mxu0 0.0
    %507 = vmatprep.subr.mxu0 0.0
    %508 = vmatpush1.xpose.msra.mxu0 0.0
    %509 = vmatprep.subr.mxu0 0.0
    %510 = vmatpush1.xpose.msra.mxu0 0.0
    %511 = vmatprep.subr.mxu0 0.0
    %512 = vmatpush1.xpose.msra.mxu0 0.0
    %513 = vmatprep.subr.mxu0 0.0
    %514 = vmatpush1.xpose.msra.mxu0 0.0
    %515 = vmatprep.subr.mxu0 0.0
    %516 = vmatpush1.xpose.msra.mxu0 0.0
    %517 = vmatprep.subr.mxu0 0.0
    %518 = vmatpush1.xpose.msra.mxu0 0.0
    %519 = vmatprep.subr.mxu0 0.0
    %520 = vmatpush1.xpose.msra.mxu0 0.0
    %521 = vmatprep.subr.mxu0 0.0
    %522 = vmatpush1.xpose.msra.mxu0 0.0
    %523 = vmatprep.subr.mxu0 0.0
    %524 = vmatpush1.xpose.msra.mxu0 0.0
    %525 = vmatprep.subr.mxu0 0.0
    %526 = vmatpush1.xpose.msra.mxu0 0.0
    %527 = vmatprep.subr.mxu0 0.0
    %528 = vmatpush1.xpose.msra.mxu0 0.0
    %529 = vmatprep.subr.mxu0 0.0
    %530 = vmatpush1.xpose.msra.mxu0 0.0
    %531 = vmatprep.subr.mxu0 0.0
    %532 = vmatpush1.xpose.msra.mxu0 0.0
    %533 = vmatprep.subr.mxu0 0.0
    %534 = vmatpush1.xpose.msra.mxu0 0.0
    %535 = vmatprep.subr.mxu0 0.0
    %536 = vmatpush1.xpose.msra.mxu0 0.0
    %537 = vmatprep.subr.mxu0 0.0
    %538 = vmatpush1.xpose.msra.mxu0 0.0
    %539 = vmatprep.subr.mxu0 0.0
    %540 = vmatpush1.xpose.msra.mxu0 0.0
    %541 = vmatprep.subr.mxu0 0.0
    %542 = vmatpush1.xpose.msra.mxu0 0.0
    %543 = vmatprep.subr.mxu0 0.0
    %544 = vmatpush1.xpose.msra.mxu0 0.0
    %545 = vmatprep.subr.mxu0 0.0
    %546 = vmatpush1.xpose.msra.mxu0 0.0
    %547 = vmatprep.subr.mxu0 0.0
    %548 = vmatpush1.xpose.msra.mxu0 0.0
    %549 = vmatprep.subr.mxu0 0.0
    %550 = vmatpush1.xpose.msra.mxu0 0.0
    %551 = vmatprep.mubr.f32.mxu0 0.0
    %552 = vmatmul.mubr.f32.gmra.mrb[0].mxu0 %v483
    %v553 = vpop.f32.mrb[0].mxu0
    %v554 = vadd.f32 0.0, %v553
    %v555 = vpop.f32.mrb[0].mxu0
    %556 = vdwg.mxu0
    %557 = vrot.lane.b32.xlu0 %v147, 120
    %v558 = vpop.permute.xlu0 %557
    %559 = vrot.lane.b32.xlu0 %v147, 88
    %v560 = vpop.permute.xlu0 %559
    %v561 = vsel %vm153, %v558, 0
    %v563 = vsel %vm153, %v560, 0
    %565 = vmatprep.subr.mxu0 0.0
    %566 = vmatpush1.xpose.msra.mxu0 %v563
    %567 = vmatprep.subr.mxu0 0.0
    %568 = vmatpush1.xpose.msra.mxu0 0.0
    %569 = vmatprep.subr.mxu0 0.0
    %570 = vmatpush1.xpose.msra.mxu0 0.0
    %571 = vmatprep.subr.mxu0 0.0
    %572 = vmatpush1.xpose.msra.mxu0 0.0
    %573 = vmatprep.subr.mxu0 0.0
    %574 = vmatpush1.xpose.msra.mxu0 0.0
    %575 = vmatprep.subr.mxu0 0.0
    %576 = vmatpush1.xpose.msra.mxu0 0.0
    %577 = vmatprep.subr.mxu0 0.0
    %578 = vmatpush1.xpose.msra.mxu0 0.0
    %579 = vmatprep.subr.mxu0 0.0
    %580 = vmatpush1.xpose.msra.mxu0 0.0
    %581 = vmatprep.subr.mxu0 0.0
    %582 = vmatpush1.xpose.msra.mxu0 0.0
    %583 = vmatprep.subr.mxu0 0.0
    %584 = vmatpush1.xpose.msra.mxu0 0.0
    %585 = vmatprep.subr.mxu0 0.0
    %586 = vmatpush1.xpose.msra.mxu0 0.0
    %587 = vmatprep.subr.mxu0 0.0
    %588 = vmatpush1.xpose.msra.mxu0 0.0
    %589 = vmatprep.subr.mxu0 0.0
    %590 = vmatpush1.xpose.msra.mxu0 0.0
    %591 = vmatprep.subr.mxu0 0.0
    %592 = vmatpush1.xpose.msra.mxu0 0.0
    %593 = vmatprep.subr.mxu0 0.0
    %594 = vmatpush1.xpose.msra.mxu0 0.0
    %595 = vmatprep.subr.mxu0 0.0
    %596 = vmatpush1.xpose.msra.mxu0 0.0
    %597 = vmatprep.subr.mxu0 0.0
    %598 = vmatpush1.xpose.msra.mxu0 0.0
    %599 = vmatprep.subr.mxu0 0.0
    %600 = vmatpush1.xpose.msra.mxu0 0.0
    %601 = vmatprep.subr.mxu0 0.0
    %602 = vmatpush1.xpose.msra.mxu0 0.0
    %603 = vmatprep.subr.mxu0 0.0
    %604 = vmatpush1.xpose.msra.mxu0 0.0
    %605 = vmatprep.subr.mxu0 0.0
    %606 = vmatpush1.xpose.msra.mxu0 0.0
    %607 = vmatprep.subr.mxu0 0.0
    %608 = vmatpush1.xpose.msra.mxu0 0.0
    %609 = vmatprep.subr.mxu0 0.0
    %610 = vmatpush1.xpose.msra.mxu0 0.0
    %611 = vmatprep.subr.mxu0 0.0
    %612 = vmatpush1.xpose.msra.mxu0 0.0
    %613 = vmatprep.subr.mxu0 0.0
    %614 = vmatpush1.xpose.msra.mxu0 0.0
    %615 = vmatprep.subr.mxu0 0.0
    %616 = vmatpush1.xpose.msra.mxu0 0.0
    %617 = vmatprep.subr.mxu0 0.0
    %618 = vmatpush1.xpose.msra.mxu0 0.0
    %619 = vmatprep.subr.mxu0 0.0
    %620 = vmatpush1.xpose.msra.mxu0 0.0
    %621 = vmatprep.subr.mxu0 0.0
    %622 = vmatpush1.xpose.msra.mxu0 0.0
    %623 = vmatprep.subr.mxu0 0.0
    %624 = vmatpush1.xpose.msra.mxu0 0.0
    %625 = vmatprep.subr.mxu0 0.0
    %626 = vmatpush1.xpose.msra.mxu0 0.0
    %627 = vmatprep.subr.mxu0 0.0
    %628 = vmatpush1.xpose.msra.mxu0 0.0
    %629 = vmatprep.mubr.f32.mxu0 0.0
    %630 = vmatmul.mubr.f32.gmra.mrb[0].mxu0 %v561
    %v631 = vpop.f32.mrb[0].mxu0
    %v632 = vadd.f32 0.0, %v631
    %v633 = vpop.f32.mrb[0].mxu0
    %634 = vdwg.mxu0
    %v635 = vsel %vm153, %v554, -inf
    %636 = vmax.xlane.f32.xlu0 %v635
    %v637 = vpop.xlane.xlu0 %636
    %v638 = vsel %vm153, %v632, -inf
    %639 = vmax.xlane.f32.xlu0 %v638
    %v640 = vpop.xlane.xlu0 %639
    %v641 = vsub.f32 %v554, %v637
    %v642 = vsub.f32 %v632, %v640
    %v643 = vmul.f32 %v641, 1.442695
    %v644 = vpow.pop %v643
    %v645 = vmul.f32 %v642, 1.442695
    %v646 = vpow.pop %v645
    %v647 = vsel %vm153, %v644, 0.0
    %648 = vadd.xlane.f32.xlu0 %v647
    %v649 = vpop.xlane.xlu0 %648
    %v650 = vsel %vm153, %v646, 0.0
    %651 = vadd.xlane.f32.xlu0 %v650
    %v652 = vpop.xlane.xlu0 %651
    %v653 = vrcp.pop %v649
    %v654 = vmul.f32 %v644, %v653
    %v655 = vrcp.pop %v652
    %v656 = vmul.f32 %v646, %v655
    %657 = vrot.lane.b32.xlu0 %v142, 56
    %v658 = vpop.permute.xlu0 %657
    %v661 = vsel %vm153, %v654, 0
    %663 = vmatprep.subr.mxu0 0.0
    %664 = vmatpush1.msra.mxu0 %v658
    %665 = vmatprep.subr.mxu0 0.0
    %666 = vmatpush1.msra.mxu0 0.0
    %667 = vmatprep.subr.mxu0 0.0
    %668 = vmatpush1.msra.mxu0 0.0
    %669 = vmatprep.subr.mxu0 0.0
    %670 = vmatpush1.msra.mxu0 0.0
    %671 = vmatprep.subr.mxu0 0.0
    %672 = vmatpush1.msra.mxu0 0.0
    %673 = vmatprep.subr.mxu0 0.0
    %674 = vmatpush1.msra.mxu0 0.0
    %675 = vmatprep.subr.mxu0 0.0
    %676 = vmatpush1.msra.mxu0 0.0
    %677 = vmatprep.subr.mxu0 0.0
    %678 = vmatpush1.msra.mxu0 0.0
    %679 = vmatprep.subr.mxu0 0.0
    %680 = vmatpush1.msra.mxu0 0.0
    %681 = vmatprep.subr.mxu0 0.0
    %682 = vmatpush1.msra.mxu0 0.0
    %683 = vmatprep.subr.mxu0 0.0
    %684 = vmatpush1.msra.mxu0 0.0
    %685 = vmatprep.subr.mxu0 0.0
    %686 = vmatpush1.msra.mxu0 0.0
    %687 = vmatprep.subr.mxu0 0.0
    %688 = vmatpush1.msra.mxu0 0.0
    %689 = vmatprep.subr.mxu0 0.0
    %690 = vmatpush1.msra.mxu0 0.0
    %691 = vmatprep.subr.mxu0 0.0
    %692 = vmatpush1.msra.mxu0 0.0
    %693 = vmatprep.subr.mxu0 0.0
    %694 = vmatpush1.msra.mxu0 0.0
    %695 = vmatprep.subr.mxu0 0.0
    %696 = vmatpush1.msra.mxu0 0.0
    %697 = vmatprep.subr.mxu0 0.0
    %698 = vmatpush1.msra.mxu0 0.0
    %699 = vmatprep.subr.mxu0 0.0
    %700 = vmatpush1.msra.mxu0 0.0
    %701 = vmatprep.subr.mxu0 0.0
    %702 = vmatpush1.msra.mxu0 0.0
    %703 = vmatprep.subr.mxu0 0.0
    %704 = vmatpush1.msra.mxu0 0.0
    %705 = vmatprep.subr.mxu0 0.0
    %706 = vmatpush1.msra.mxu0 0.0
    %707 = vmatprep.subr.mxu0 0.0
    %708 = vmatpush1.msra.mxu0 0.0
    %709 = vmatprep.subr.mxu0 0.0
    %710 = vmatpush1.msra.mxu0 0.0
    %711 = vmatprep.subr.mxu0 0.0
    %712 = vmatpush1.msra.mxu0 0.0
    %713 = vmatprep.subr.mxu0 0.0
    %714 = vmatpush1.msra.mxu0 0.0
    %715 = vmatprep.subr.mxu0 0.0
    %716 = vmatpush1.msra.mxu0 0.0
    %717 = vmatprep.subr.mxu0 0.0
    %718 = vmatpush1.msra.mxu0 0.0
    %719 = vmatprep.subr.mxu0 0.0
    %720 = vmatpush1.msra.mxu0 0.0
    %721 = vmatprep.subr.mxu0 0.0
    %722 = vmatpush1.msra.mxu0 0.0
    %723 = vmatprep.subr.mxu0 0.0
    %724 = vmatpush1.msra.mxu0 0.0
    %725 = vmatprep.subr.mxu0 0.0
    %726 = vmatpush1.msra.mxu0 0.0
    %727 = vmatprep.mubr.f32.mxu0 0.0
    %728 = vmatmul.mubr.f32.gmra.mrb[0].mxu0 %v661
    %v729 = vpop.f32.mrb[0].mxu0
    %v730 = vadd.f32 0.0, %v729
    %v731 = vpop.f32.mrb[0].mxu0
    %732 = vdwg.mxu0
    %733 = vrot.lane.b32.xlu0 %v147, 56
    %v734 = vpop.permute.xlu0 %733
    %v737 = vsel %vm153, %v656, 0
    %739 = vmatprep.subr.mxu0 0.0
    %740 = vmatpush1.msra.mxu0 %v734
    %741 = vmatprep.subr.mxu0 0.0
    %742 = vmatpush1.msra.mxu0 0.0
    %743 = vmatprep.subr.mxu0 0.0
    %744 = vmatpush1.msra.mxu0 0.0
    %745 = vmatprep.subr.mxu0 0.0
    %746 = vmatpush1.msra.mxu0 0.0
    %747 = vmatprep.subr.mxu0 0.0
    %748 = vmatpush1.msra.mxu0 0.0
    %749 = vmatprep.subr.mxu0 0.0
    %750 = vmatpush1.msra.mxu0 0.0
    %751 = vmatprep.subr.mxu0 0.0
    %752 = vmatpush1.msra.mxu0 0.0
    %753 = vmatprep.subr.mxu0 0.0
    %754 = vmatpush1.msra.mxu0 0.0
    %755 = vmatprep.subr.mxu0 0.0
    %756 = vmatpush1.msra.mxu0 0.0
    %757 = vmatprep.subr.mxu0 0.0
    %758 = vmatpush1.msra.mxu0 0.0
    %759 = vmatprep.subr.mxu0 0.0
    %760 = vmatpush1.msra.mxu0 0.0
    %761 = vmatprep.subr.mxu0 0.0
    %762 = vmatpush1.msra.mxu0 0.0
    %763 = vmatprep.subr.mxu0 0.0
    %764 = vmatpush1.msra.mxu0 0.0
    %765 = vmatprep.subr.mxu0 0.0
    %766 = vmatpush1.msra.mxu0 0.0
    %767 = vmatprep.subr.mxu0 0.0
    %768 = vmatpush1.msra.mxu0 0.0
    %769 = vmatprep.subr.mxu0 0.0
    %770 = vmatpush1.msra.mxu0 0.0
    %771 = vmatprep.subr.mxu0 0.0
    %772 = vmatpush1.msra.mxu0 0.0
    %773 = vmatprep.subr.mxu0 0.0
    %774 = vmatpush1.msra.mxu0 0.0
    %775 = vmatprep.subr.mxu0 0.0
    %776 = vmatpush1.msra.mxu0 0.0
    %777 = vmatprep.subr.mxu0 0.0
    %778 = vmatpush1.msra.mxu0 0.0
    %779 = vmatprep.subr.mxu0 0.0
    %780 = vmatpush1.msra.mxu0 0.0
    %781 = vmatprep.subr.mxu0 0.0
    %782 = vmatpush1.msra.mxu0 0.0
    %783 = vmatprep.subr.mxu0 0.0
    %784 = vmatpush1.msra.mxu0 0.0
    %785 = vmatprep.subr.mxu0 0.0
    %786 = vmatpush1.msra.mxu0 0.0
    %787 = vmatprep.subr.mxu0 0.0
    %788 = vmatpush1.msra.mxu0 0.0
    %789 = vmatprep.subr.mxu0 0.0
    %790 = vmatpush1.msra.mxu0 0.0
    %791 = vmatprep.subr.mxu0 0.0
    %792 = vmatpush1.msra.mxu0 0.0
    %793 = vmatprep.subr.mxu0 0.0
    %794 = vmatpush1.msra.mxu0 0.0
    %795 = vmatprep.subr.mxu0 0.0
    %796 = vmatpush1.msra.mxu0 0.0
    %797 = vmatprep.subr.mxu0 0.0
    %798 = vmatpush1.msra.mxu0 0.0
    %799 = vmatprep.subr.mxu0 0.0
    %800 = vmatpush1.msra.mxu0 0.0
    %801 = vmatprep.subr.mxu0 0.0
    %802 = vmatpush1.msra.mxu0 0.0
    %803 = vmatprep.mubr.f32.mxu0 0.0
    %804 = vmatmul.mubr.f32.gmra.mrb[0].mxu0 %v737
    %v805 = vpop.f32.mrb[0].mxu0
    %v806 = vadd.f32 0.0, %v805
    %v807 = vpop.f32.mrb[0].mxu0
    %808 = vdwg.mxu0
    %809 = vrot.lane.b32.xlu0 %v142, 112
    %v810 = vpop.permute.xlu0 %809
    %811 = vrot.lane.b32.xlu0 %v142, 80
    %v812 = vpop.permute.xlu0 %811
    %v813 = vsel %vm153, %v810, 0
    %v815 = vsel %vm153, %v812, 0
    %817 = vmatprep.subr.mxu0 0.0
    %818 = vmatpush1.xpose.msra.mxu0 %v815
    %819 = vmatprep.subr.mxu0 0.0
    %820 = vmatpush1.xpose.msra.mxu0 0.0
    %821 = vmatprep.subr.mxu0 0.0
    %822 = vmatpush1.xpose.msra.mxu0 0.0
    %823 = vmatprep.subr.mxu0 0.0
    %824 = vmatpush1.xpose.msra.mxu0 0.0
    %825 = vmatprep.subr.mxu0 0.0
    %826 = vmatpush1.xpose.msra.mxu0 0.0
    %827 = vmatprep.subr.mxu0 0.0
    %828 = vmatpush1.xpose.msra.mxu0 0.0
    %829 = vmatprep.subr.mxu0 0.0
    %830 = vmatpush1.xpose.msra.mxu0 0.0
    %831 = vmatprep.subr.mxu0 0.0
    %832 = vmatpush1.xpose.msra.mxu0 0.0
    %833 = vmatprep.subr.mxu0 0.0
    %834 = vmatpush1.xpose.msra.mxu0 0.0
    %835 = vmatprep.subr.mxu0 0.0
    %836 = vmatpush1.xpose.msra.mxu0 0.0
    %837 = vmatprep.subr.mxu0 0.0
    %838 = vmatpush1.xpose.msra.mxu0 0.0
    %839 = vmatprep.subr.mxu0 0.0
    %840 = vmatpush1.xpose.msra.mxu0 0.0
    %841 = vmatprep.subr.mxu0 0.0
    %842 = vmatpush1.xpose.msra.mxu0 0.0
    %843 = vmatprep.subr.mxu0 0.0
    %844 = vmatpush1.xpose.msra.mxu0 0.0
    %845 = vmatprep.subr.mxu0 0.0
    %846 = vmatpush1.xpose.msra.mxu0 0.0
    %847 = vmatprep.subr.mxu0 0.0
    %848 = vmatpush1.xpose.msra.mxu0 0.0
    %849 = vmatprep.subr.mxu0 0.0
    %850 = vmatpush1.xpose.msra.mxu0 0.0
    %851 = vmatprep.subr.mxu0 0.0
    %852 = vmatpush1.xpose.msra.mxu0 0.0
    %853 = vmatprep.subr.mxu0 0.0
    %854 = vmatpush1.xpose.msra.mxu0 0.0
    %855 = vmatprep.subr.mxu0 0.0
    %856 = vmatpush1.xpose.msra.mxu0 0.0
    %857 = vmatprep.subr.mxu0 0.0
    %858 = vmatpush1.xpose.msra.mxu0 0.0
    %859 = vmatprep.subr.mxu0 0.0
    %860 = vmatpush1.xpose.msra.mxu0 0.0
    %861 = vmatprep.subr.mxu0 0.0
    %862 = vmatpush1.xpose.msra.mxu0 0.0
    %863 = vmatprep.subr.mxu0 0.0
    %864 = vmatpush1.xpose.msra.mxu0 0.0
    %865 = vmatprep.subr.mxu0 0.0
    %866 = vmatpush1.xpose.msra.mxu0 0.0
    %867 = vmatprep.subr.mxu0 0.0
    %868 = vmatpush1.xpose.msra.mxu0 0.0
    %869 = vmatprep.subr.mxu0 0.0
    %870 = vmatpush1.xpose.msra.mxu0 0.0
    %871 = vmatprep.subr.mxu0 0.0
    %872 = vmatpush1.xpose.msra.mxu0 0.0
    %873 = vmatprep.subr.mxu0 0.0
    %874 = vmatpush1.xpose.msra.mxu0 0.0
    %875 = vmatprep.subr.mxu0 0.0
    %876 = vmatpush1.xpose.msra.mxu0 0.0
    %877 = vmatprep.subr.mxu0 0.0
    %878 = vmatpush1.xpose.msra.mxu0 0.0
    %879 = vmatprep.subr.mxu0 0.0
    %880 = vmatpush1.xpose.msra.mxu0 0.0
    %881 = vmatprep.mubr.f32.mxu0 0.0
    %882 = vmatmul.mubr.f32.gmra.mrb[0].mxu0 %v813
    %v883 = vpop.f32.mrb[0].mxu0
    %v884 = vadd.f32 0.0, %v883
    %v885 = vpop.f32.mrb[0].mxu0
    %886 = vdwg.mxu0
    %887 = vrot.lane.b32.xlu0 %v147, 112
    %v888 = vpop.permute.xlu0 %887
    %889 = vrot.lane.b32.xlu0 %v147, 80
    %v890 = vpop.permute.xlu0 %889
    %v891 = vsel %vm153, %v888, 0
    %v893 = vsel %vm153, %v890, 0
    %895 = vmatprep.subr.mxu0 0.0
    %896 = vmatpush1.xpose.msra.mxu0 %v893
    %897 = vmatprep.subr.mxu0 0.0
    %898 = vmatpush1.xpose.msra.mxu0 0.0
    %899 = vmatprep.subr.mxu0 0.0
    %900 = vmatpush1.xpose.msra.mxu0 0.0
    %901 = vmatprep.subr.mxu0 0.0
    %902 = vmatpush1.xpose.msra.mxu0 0.0
    %903 = vmatprep.subr.mxu0 0.0
    %904 = vmatpush1.xpose.msra.mxu0 0.0
    %905 = vmatprep.subr.mxu0 0.0
    %906 = vmatpush1.xpose.msra.mxu0 0.0
    %907 = vmatprep.subr.mxu0 0.0
    %908 = vmatpush1.xpose.msra.mxu0 0.0
    %909 = vmatprep.subr.mxu0 0.0
    %910 = vmatpush1.xpose.msra.mxu0 0.0
    %911 = vmatprep.subr.mxu0 0.0
    %912 = vmatpush1.xpose.msra.mxu0 0.0
    %913 = vmatprep.subr.mxu0 0.0
    %914 = vmatpush1.xpose.msra.mxu0 0.0
    %915 = vmatprep.subr.mxu0 0.0
    %916 = vmatpush1.xpose.msra.mxu0 0.0
    %917 = vmatprep.subr.mxu0 0.0
    %918 = vmatpush1.xpose.msra.mxu0 0.0
    %919 = vmatprep.subr.mxu0 0.0
    %920 = vmatpush1.xpose.msra.mxu0 0.0
    %921 = vmatprep.subr.mxu0 0.0
    %922 = vmatpush1.xpose.msra.mxu0 0.0
    %923 = vmatprep.subr.mxu0 0.0
    %924 = vmatpush1.xpose.msra.mxu0 0.0
    %925 = vmatprep.subr.mxu0 0.0
    %926 = vmatpush1.xpose.msra.mxu0 0.0
    %927 = vmatprep.subr.mxu0 0.0
    %928 = vmatpush1.xpose.msra.mxu0 0.0
    %929 = vmatprep.subr.mxu0 0.0
    %930 = vmatpush1.xpose.msra.mxu0 0.0
    %931 = vmatprep.subr.mxu0 0.0
    %932 = vmatpush1.xpose.msra.mxu0 0.0
    %933 = vmatprep.subr.mxu0 0.0
    %934 = vmatpush1.xpose.msra.mxu0 0.0
    %935 = vmatprep.subr.mxu0 0.0
    %936 = vmatpush1.xpose.msra.mxu0 0.0
    %937 = vmatprep.subr.mxu0 0.0
    %938 = vmatpush1.xpose.msra.mxu0 0.0
    %939 = vmatprep.subr.mxu0 0.0
    %940 = vmatpush1.xpose.msra.mxu0 0.0
    %941 = vmatprep.subr.mxu0 0.0
    %942 = vmatpush1.xpose.msra.mxu0 0.0
    %943 = vmatprep.subr.mxu0 0.0
    %944 = vmatpush1.xpose.msra.mxu0 0.0
    %945 = vmatprep.subr.mxu0 0.0
    %946 = vmatpush1.xpose.msra.mxu0 0.0
    %947 = vmatprep.subr.mxu0 0.0
    %948 = vmatpush1.xpose.msra.mxu0 0.0
    %949 = vmatprep.subr.mxu0 0.0
    %950 = vmatpush1.xpose.msra.mxu0 0.0
    %951 = vmatprep.subr.mxu0 0.0
    %952 = vmatpush1.xpose.msra.mxu0 0.0
    %953 = vmatprep.subr.mxu0 0.0
    %954 = vmatpush1.xpose.msra.mxu0 0.0
    %955 = vmatprep.subr.mxu0 0.0
    %956 = vmatpush1.xpose.msra.mxu0 0.0
    %957 = vmatprep.subr.mxu0 0.0
    %958 = vmatpush1.xpose.msra.mxu0 0.0
    %959 = vmatprep.mubr.f32.mxu0 0.0
    %960 = vmatmul.mubr.f32.gmra.mrb[0].mxu0 %v891
    %v961 = vpop.f32.mrb[0].mxu0
    %v962 = vadd.f32 0.0, %v961
    %v963 = vpop.f32.mrb[0].mxu0
    %964 = vdwg.mxu0
    %v965 = vsel %vm153, %v884, -inf
    %966 = vmax.xlane.f32.xlu0 %v965
    %v967 = vpop.xlane.xlu0 %966
    %v968 = vsel %vm153, %v962, -inf
    %969 = vmax.xlane.f32.xlu0 %v968
    %v970 = vpop.xlane.xlu0 %969
    %v971 = vsub.f32 %v884, %v967
    %v972 = vsub.f32 %v962, %v970
    %v973 = vmul.f32 %v971, 1.442695
    %v974 = vpow.pop %v973
    %v975 = vmul.f32 %v972, 1.442695
    %v976 = vpow.pop %v975
    %v977 = vsel %vm153, %v974, 0.0
    %978 = vadd.xlane.f32.xlu0 %v977
    %v979 = vpop.xlane.xlu0 %978
    %v980 = vsel %vm153, %v976, 0.0
    %981 = vadd.xlane.f32.xlu0 %v980
    %v982 = vpop.xlane.xlu0 %981
    %v983 = vrcp.pop %v979
    %v984 = vmul.f32 %v974, %v983
    %v985 = vrcp.pop %v982
    %v986 = vmul.f32 %v976, %v985
    %987 = vrot.lane.b32.xlu0 %v142, 48
    %v988 = vpop.permute.xlu0 %987
    %v991 = vsel %vm153, %v984, 0
    %993 = vmatprep.subr.mxu0 0.0
    %994 = vmatpush1.msra.mxu0 %v988
    %995 = vmatprep.subr.mxu0 0.0
    %996 = vmatpush1.msra.mxu0 0.0
    %997 = vmatprep.subr.mxu0 0.0
    %998 = vmatpush1.msra.mxu0 0.0
    %999 = vmatprep.subr.mxu0 0.0
    %1000 = vmatpush1.msra.mxu0 0.0
    %1001 = vmatprep.subr.mxu0 0.0
    %1002 = vmatpush1.msra.mxu0 0.0
    %1003 = vmatprep.subr.mxu0 0.0
    %1004 = vmatpush1.msra.mxu0 0.0
    %1005 = vmatprep.subr.mxu0 0.0
    %1006 = vmatpush1.msra.mxu0 0.0
    %1007 = vmatprep.subr.mxu0 0.0
    %1008 = vmatpush1.msra.mxu0 0.0
    %1009 = vmatprep.subr.mxu0 0.0
    %1010 = vmatpush1.msra.mxu0 0.0
    %1011 = vmatprep.subr.mxu0 0.0
    %1012 = vmatpush1.msra.mxu0 0.0
    %1013 = vmatprep.subr.mxu0 0.0
    %1014 = vmatpush1.msra.mxu0 0.0
    %1015 = vmatprep.subr.mxu0 0.0
    %1016 = vmatpush1.msra.mxu0 0.0
    %1017 = vmatprep.subr.mxu0 0.0
    %1018 = vmatpush1.msra.mxu0 0.0
    %1019 = vmatprep.subr.mxu0 0.0
    %1020 = vmatpush1.msra.mxu0 0.0
    %1021 = vmatprep.subr.mxu0 0.0
    %1022 = vmatpush1.msra.mxu0 0.0
    %1023 = vmatprep.subr.mxu0 0.0
    %1024 = vmatpush1.msra.mxu0 0.0
    %1025 = vmatprep.subr.mxu0 0.0
    %1026 = vmatpush1.msra.mxu0 0.0
    %1027 = vmatprep.subr.mxu0 0.0
    %1028 = vmatpush1.msra.mxu0 0.0
    %1029 = vmatprep.subr.mxu0 0.0
    %1030 = vmatpush1.msra.mxu0 0.0
    %1031 = vmatprep.subr.mxu0 0.0
    %1032 = vmatpush1.msra.mxu0 0.0
    %1033 = vmatprep.subr.mxu0 0.0
    %1034 = vmatpush1.msra.mxu0 0.0
    %1035 = vmatprep.subr.mxu0 0.0
    %1036 = vmatpush1.msra.mxu0 0.0
    %1037 = vmatprep.subr.mxu0 0.0
    %1038 = vmatpush1.msra.mxu0 0.0
    %1039 = vmatprep.subr.mxu0 0.0
    %1040 = vmatpush1.msra.mxu0 0.0
    %1041 = vmatprep.subr.mxu0 0.0
    %1042 = vmatpush1.msra.mxu0 0.0
    %1043 = vmatprep.subr.mxu0 0.0
    %1044 = vmatpush1.msra.mxu0 0.0
    %1045 = vmatprep.subr.mxu0 0.0
    %1046 = vmatpush1.msra.mxu0 0.0
    %1047 = vmatprep.subr.mxu0 0.0
    %1048 = vmatpush1.msra.mxu0 0.0
    %1049 = vmatprep.subr.mxu0 0.0
    %1050 = vmatpush1.msra.mxu0 0.0
    %1051 = vmatprep.subr.mxu0 0.0
    %1052 = vmatpush1.msra.mxu0 0.0
    %1053 = vmatprep.subr.mxu0 0.0
    %1054 = vmatpush1.msra.mxu0 0.0
    %1055 = vmatprep.subr.mxu0 0.0
    %1056 = vmatpush1.msra.mxu0 0.0
    %1057 = vmatprep.mubr.f32.mxu0 0.0
    %1058 = vmatmul.mubr.f32.gmra.mrb[0].mxu0 %v991
    %v1059 = vpop.f32.mrb[0].mxu0
    %v1060 = vadd.f32 0.0, %v1059
    %v1061 = vpop.f32.mrb[0].mxu0
    %1062 = vdwg.mxu0
    %1063 = vrot.lane.b32.xlu0 %v147, 48
    %v1064 = vpop.permute.xlu0 %1063
    %v1067 = vsel %vm153, %v986, 0
    %1069 = vmatprep.subr.mxu0 0.0
    %1070 = vmatpush1.msra.mxu0 %v1064
    %1071 = vmatprep.subr.mxu0 0.0
    %1072 = vmatpush1.msra.mxu0 0.0
    %1073 = vmatprep.subr.mxu0 0.0
    %1074 = vmatpush1.msra.mxu0 0.0
    %1075 = vmatprep.subr.mxu0 0.0
    %1076 = vmatpush1.msra.mxu0 0.0
    %1077 = vmatprep.subr.mxu0 0.0
    %1078 = vmatpush1.msra.mxu0 0.0
    %1079 = vmatprep.subr.mxu0 0.0
    %1080 = vmatpush1.msra.mxu0 0.0
    %1081 = vmatprep.subr.mxu0 0.0
    %1082 = vmatpush1.msra.mxu0 0.0
    %1083 = vmatprep.subr.mxu0 0.0
    %1084 = vmatpush1.msra.mxu0 0.0
    %1085 = vmatprep.subr.mxu0 0.0
    %1086 = vmatpush1.msra.mxu0 0.0
    %1087 = vmatprep.subr.mxu0 0.0
    %1088 = vmatpush1.msra.mxu0 0.0
    %1089 = vmatprep.subr.mxu0 0.0
    %1090 = vmatpush1.msra.mxu0 0.0
    %1091 = vmatprep.subr.mxu0 0.0
    %1092 = vmatpush1.msra.mxu0 0.0
    %1093 = vmatprep.subr.mxu0 0.0
    %1094 = vmatpush1.msra.mxu0 0.0
    %1095 = vmatprep.subr.mxu0 0.0
    %1096 = vmatpush1.msra.mxu0 0.0
    %1097 = vmatprep.subr.mxu0 0.0
    %1098 = vmatpush1.msra.mxu0 0.0
    %1099 = vmatprep.subr.mxu0 0.0
    %1100 = vmatpush1.msra.mxu0 0.0
    %1101 = vmatprep.subr.mxu0 0.0
    %1102 = vmatpush1.msra.mxu0 0.0
    %1103 = vmatprep.subr.mxu0 0.0
    %1104 = vmatpush1.msra.mxu0 0.0
    %1105 = vmatprep.subr.mxu0 0.0
    %1106 = vmatpush1.msra.mxu0 0.0
    %1107 = vmatprep.subr.mxu0 0.0
    %1108 = vmatpush1.msra.mxu0 0.0
    %1109 = vmatprep.subr.mxu0 0.0
    %1110 = vmatpush1.msra.mxu0 0.0
    %1111 = vmatprep.subr.mxu0 0.0
    %1112 = vmatpush1.msra.mxu0 0.0
    %1113 = vmatprep.subr.mxu0 0.0
    %1114 = vmatpush1.msra.mxu0 0.0
    %1115 = vmatprep.subr.mxu0 0.0
    %1116 = vmatpush1.msra.mxu0 0.0
    %1117 = vmatprep.subr.mxu0 0.0
    %1118 = vmatpush1.msra.mxu0 0.0
    %1119 = vmatprep.subr.mxu0 0.0
    %1120 = vmatpush1.msra.mxu0 0.0
    %1121 = vmatprep.subr.mxu0 0.0
    %1122 = vmatpush1.msra.mxu0 0.0
    %1123 = vmatprep.subr.mxu0 0.0
    %1124 = vmatpush1.msra.mxu0 0.0
    %1125 = vmatprep.subr.mxu0 0.0
    %1126 = vmatpush1.msra.mxu0 0.0
    %1127 = vmatprep.subr.mxu0 0.0
    %1128 = vmatpush1.msra.mxu0 0.0
    %1129 = vmatprep.subr.mxu0 0.0
    %1130 = vmatpush1.msra.mxu0 0.0
    %1131 = vmatprep.subr.mxu0 0.0
    %1132 = vmatpush1.msra.mxu0 0.0
    %1133 = vmatprep.mubr.f32.mxu0 0.0
    %1134 = vmatmul.mubr.f32.gmra.mrb[0].mxu0 %v1067
    %v1135 = vpop.f32.mrb[0].mxu0
    %v1136 = vadd.f32 0.0, %v1135
    %v1137 = vpop.f32.mrb[0].mxu0
    %1138 = vdwg.mxu0
    %1139 = vrot.lane.b32.xlu0 %v142, 104
    %v1140 = vpop.permute.xlu0 %1139
    %1141 = vrot.lane.b32.xlu0 %v142, 72
    %v1142 = vpop.permute.xlu0 %1141
    %v1143 = vsel %vm153, %v1140, 0
    %v1145 = vsel %vm153, %v1142, 0
    %1147 = vmatprep.subr.mxu0 0.0
    %1148 = vmatpush1.xpose.msra.mxu0 %v1145
    %1149 = vmatprep.subr.mxu0 0.0
    %1150 = vmatpush1.xpose.msra.mxu0 0.0
    %1151 = vmatprep.subr.mxu0 0.0
    %1152 = vmatpush1.xpose.msra.mxu0 0.0
    %1153 = vmatprep.subr.mxu0 0.0
    %1154 = vmatpush1.xpose.msra.mxu0 0.0
    %1155 = vmatprep.subr.mxu0 0.0
    %1156 = vmatpush1.xpose.msra.mxu0 0.0
    %1157 = vmatprep.subr.mxu0 0.0
    %1158 = vmatpush1.xpose.msra.mxu0 0.0
    %1159 = vmatprep.subr.mxu0 0.0
    %1160 = vmatpush1.xpose.msra.mxu0 0.0
    %1161 = vmatprep.subr.mxu0 0.0
    %1162 = vmatpush1.xpose.msra.mxu0 0.0
    %1163 = vmatprep.subr.mxu0 0.0
    %1164 = vmatpush1.xpose.msra.mxu0 0.0
    %1165 = vmatprep.subr.mxu0 0.0
    %1166 = vmatpush1.xpose.msra.mxu0 0.0
    %1167 = vmatprep.subr.mxu0 0.0
    %1168 = vmatpush1.xpose.msra.mxu0 0.0
    %1169 = vmatprep.subr.mxu0 0.0
    %1170 = vmatpush1.xpose.msra.mxu0 0.0
    %1171 = vmatprep.subr.mxu0 0.0
    %1172 = vmatpush1.xpose.msra.mxu0 0.0
    %1173 = vmatprep.subr.mxu0 0.0
    %1174 = vmatpush1.xpose.msra.mxu0 0.0
    %1175 = vmatprep.subr.mxu0 0.0
    %1176 = vmatpush1.xpose.msra.mxu0 0.0
    %1177 = vmatprep.subr.mxu0 0.0
    %1178 = vmatpush1.xpose.msra.mxu0 0.0
    %1179 = vmatprep.subr.mxu0 0.0
    %1180 = vmatpush1.xpose.msra.mxu0 0.0
    %1181 = vmatprep.subr.mxu0 0.0
    %1182 = vmatpush1.xpose.msra.mxu0 0.0
    %1183 = vmatprep.subr.mxu0 0.0
    %1184 = vmatpush1.xpose.msra.mxu0 0.0
    %1185 = vmatprep.subr.mxu0 0.0
    %1186 = vmatpush1.xpose.msra.mxu0 0.0
    %1187 = vmatprep.subr.mxu0 0.0
    %1188 = vmatpush1.xpose.msra.mxu0 0.0
    %1189 = vmatprep.subr.mxu0 0.0
    %1190 = vmatpush1.xpose.msra.mxu0 0.0
    %1191 = vmatprep.subr.mxu0 0.0
    %1192 = vmatpush1.xpose.msra.mxu0 0.0
    %1193 = vmatprep.subr.mxu0 0.0
    %1194 = vmatpush1.xpose.msra.mxu0 0.0
    %1195 = vmatprep.subr.mxu0 0.0
    %1196 = vmatpush1.xpose.msra.mxu0 0.0
    %1197 = vmatprep.subr.mxu0 0.0
    %1198 = vmatpush1.xpose.msra.mxu0 0.0
    %1199 = vmatprep.subr.mxu0 0.0
    %1200 = vmatpush1.xpose.msra.mxu0 0.0
    %1201 = vmatprep.subr.mxu0 0.0
    %1202 = vmatpush1.xpose.msra.mxu0 0.0
    %1203 = vmatprep.subr.mxu0 0.0
    %1204 = vmatpush1.xpose.msra.mxu0 0.0
    %1205 = vmatprep.subr.mxu0 0.0
    %1206 = vmatpush1.xpose.msra.mxu0 0.0
    %1207 = vmatprep.subr.mxu0 0.0
    %1208 = vmatpush1.xpose.msra.mxu0 0.0
    %1209 = vmatprep.subr.mxu0 0.0
    %1210 = vmatpush1.xpose.msra.mxu0 0.0
    %1211 = vmatprep.mubr.f32.mxu0 0.0
    %1212 = vmatmul.mubr.f32.gmra.mrb[0].mxu0 %v1143
    %v1213 = vpop.f32.mrb[0].mxu0
    %v1214 = vadd.f32 0.0, %v1213
    %v1215 = vpop.f32.mrb[0].mxu0
    %1216 = vdwg.mxu0
    %1217 = vrot.lane.b32.xlu0 %v147, 104
    %v1218 = vpop.permute.xlu0 %1217
    %1219 = vrot.lane.b32.xlu0 %v147, 72
    %v1220 = vpop.permute.xlu0 %1219
    %v1221 = vsel %vm153, %v1218, 0
    %v1223 = vsel %vm153, %v1220, 0
    %1225 = vmatprep.subr.mxu0 0.0
    %1226 = vmatpush1.xpose.msra.mxu0 %v1223
    %1227 = vmatprep.subr.mxu0 0.0
    %1228 = vmatpush1.xpose.msra.mxu0 0.0
    %1229 = vmatprep.subr.mxu0 0.0
    %1230 = vmatpush1.xpose.msra.mxu0 0.0
    %1231 = vmatprep.subr.mxu0 0.0
    %1232 = vmatpush1.xpose.msra.mxu0 0.0
    %1233 = vmatprep.subr.mxu0 0.0
    %1234 = vmatpush1.xpose.msra.mxu0 0.0
    %1235 = vmatprep.subr.mxu0 0.0
    %1236 = vmatpush1.xpose.msra.mxu0 0.0
    %1237 = vmatprep.subr.mxu0 0.0
    %1238 = vmatpush1.xpose.msra.mxu0 0.0
    %1239 = vmatprep.subr.mxu0 0.0
    %1240 = vmatpush1.xpose.msra.mxu0 0.0
    %1241 = vmatprep.subr.mxu0 0.0
    %1242 = vmatpush1.xpose.msra.mxu0 0.0
    %1243 = vmatprep.subr.mxu0 0.0
    %1244 = vmatpush1.xpose.msra.mxu0 0.0
    %1245 = vmatprep.subr.mxu0 0.0
    %1246 = vmatpush1.xpose.msra.mxu0 0.0
    %1247 = vmatprep.subr.mxu0 0.0
    %1248 = vmatpush1.xpose.msra.mxu0 0.0
    %1249 = vmatprep.subr.mxu0 0.0
    %1250 = vmatpush1.xpose.msra.mxu0 0.0
    %1251 = vmatprep.subr.mxu0 0.0
    %1252 = vmatpush1.xpose.msra.mxu0 0.0
    %1253 = vmatprep.subr.mxu0 0.0
    %1254 = vmatpush1.xpose.msra.mxu0 0.0
    %1255 = vmatprep.subr.mxu0 0.0
    %1256 = vmatpush1.xpose.msra.mxu0 0.0
    %1257 = vmatprep.subr.mxu0 0.0
    %1258 = vmatpush1.xpose.msra.mxu0 0.0
    %1259 = vmatprep.subr.mxu0 0.0
    %1260 = vmatpush1.xpose.msra.mxu0 0.0
    %1261 = vmatprep.subr.mxu0 0.0
    %1262 = vmatpush1.xpose.msra.mxu0 0.0
    %1263 = vmatprep.subr.mxu0 0.0
    %1264 = vmatpush1.xpose.msra.mxu0 0.0
    %1265 = vmatprep.subr.mxu0 0.0
    %1266 = vmatpush1.xpose.msra.mxu0 0.0
    %1267 = vmatprep.subr.mxu0 0.0
    %1268 = vmatpush1.xpose.msra.mxu0 0.0
    %1269 = vmatprep.subr.mxu0 0.0
    %1270 = vmatpush1.xpose.msra.mxu0 0.0
    %1271 = vmatprep.subr.mxu0 0.0
    %1272 = vmatpush1.xpose.msra.mxu0 0.0
    %1273 = vmatprep.subr.mxu0 0.0
    %1274 = vmatpush1.xpose.msra.mxu0 0.0
    %1275 = vmatprep.subr.mxu0 0.0
    %1276 = vmatpush1.xpose.msra.mxu0 0.0
    %1277 = vmatprep.subr.mxu0 0.0
    %1278 = vmatpush1.xpose.msra.mxu0 0.0
    %1279 = vmatprep.subr.mxu0 0.0
    %1280 = vmatpush1.xpose.msra.mxu0 0.0
    %1281 = vmatprep.subr.mxu0 0.0
    %1282 = vmatpush1.xpose.msra.mxu0 0.0
    %1283 = vmatprep.subr.mxu0 0.0
    %1284 = vmatpush1.xpose.msra.mxu0 0.0
    %1285 = vmatprep.subr.mxu0 0.0
    %1286 = vmatpush1.xpose.msra.mxu0 0.0
    %1287 = vmatprep.subr.mxu0 0.0
    %1288 = vmatpush1.xpose.msra.mxu0 0.0
    %1289 = vmatprep.mubr.f32.mxu0 0.0
    %1290 = vmatmul.mubr.f32.gmra.mrb[0].mxu0 %v1221
    %v1291 = vpop.f32.mrb[0].mxu0
    %v1292 = vadd.f32 0.0, %v1291
    %v1293 = vpop.f32.mrb[0].mxu0
    %1294 = vdwg.mxu0
    %v1295 = vsel %vm153, %v1214, -inf
    %1296 = vmax.xlane.f32.xlu0 %v1295
    %v1297 = vpop.xlane.xlu0 %1296
    %v1298 = vsel %vm153, %v1292, -inf
    %1299 = vmax.xlane.f32.xlu0 %v1298
    %v1300 = vpop.xlane.xlu0 %1299
    %v1301 = vsub.f32 %v1214, %v1297
    %v1302 = vsub.f32 %v1292, %v1300
    %v1303 = vmul.f32 %v1301, 1.442695
    %v1304 = vpow.pop %v1303
    %v1305 = vmul.f32 %v1302, 1.442695
    %v1306 = vpow.pop %v1305
    %v1307 = vsel %vm153, %v1304, 0.0
    %1308 = vadd.xlane.f32.xlu0 %v1307
    %v1309 = vpop.xlane.xlu0 %1308
    %v1310 = vsel %vm153, %v1306, 0.0
    %1311 = vadd.xlane.f32.xlu0 %v1310
    %v1312 = vpop.xlane.xlu0 %1311
    %v1313 = vrcp.pop %v1309
    %v1314 = vmul.f32 %v1304, %v1313
    %v1315 = vrcp.pop %v1312
    %v1316 = vmul.f32 %v1306, %v1315
    %1317 = vrot.lane.b32.xlu0 %v142, 40
    %v1318 = vpop.permute.xlu0 %1317
    %v1321 = vsel %vm153, %v1314, 0
    %1323 = vmatprep.subr.mxu0 0.0
    %1324 = vmatpush1.msra.mxu0 %v1318
    %1325 = vmatprep.subr.mxu0 0.0
    %1326 = vmatpush1.msra.mxu0 0.0
    %1327 = vmatprep.subr.mxu0 0.0
    %1328 = vmatpush1.msra.mxu0 0.0
    %1329 = vmatprep.subr.mxu0 0.0
    %1330 = vmatpush1.msra.mxu0 0.0
    %1331 = vmatprep.subr.mxu0 0.0
    %1332 = vmatpush1.msra.mxu0 0.0
    %1333 = vmatprep.subr.mxu0 0.0
    %1334 = vmatpush1.msra.mxu0 0.0
    %1335 = vmatprep.subr.mxu0 0.0
    %1336 = vmatpush1.msra.mxu0 0.0
    %1337 = vmatprep.subr.mxu0 0.0
    %1338 = vmatpush1.msra.mxu0 0.0
    %1339 = vmatprep.subr.mxu0 0.0
    %1340 = vmatpush1.msra.mxu0 0.0
    %1341 = vmatprep.subr.mxu0 0.0
    %1342 = vmatpush1.msra.mxu0 0.0
    %1343 = vmatprep.subr.mxu0 0.0
    %1344 = vmatpush1.msra.mxu0 0.0
    %1345 = vmatprep.subr.mxu0 0.0
    %1346 = vmatpush1.msra.mxu0 0.0
    %1347 = vmatprep.subr.mxu0 0.0
    %1348 = vmatpush1.msra.mxu0 0.0
    %1349 = vmatprep.subr.mxu0 0.0
    %1350 = vmatpush1.msra.mxu0 0.0
    %1351 = vmatprep.subr.mxu0 0.0
    %1352 = vmatpush1.msra.mxu0 0.0
    %1353 = vmatprep.subr.mxu0 0.0
    %1354 = vmatpush1.msra.mxu0 0.0
    %1355 = vmatprep.subr.mxu0 0.0
    %1356 = vmatpush1.msra.mxu0 0.0
    %1357 = vmatprep.subr.mxu0 0.0
    %1358 = vmatpush1.msra.mxu0 0.0
    %1359 = vmatprep.subr.mxu0 0.0
    %1360 = vmatpush1.msra.mxu0 0.0
    %1361 = vmatprep.subr.mxu0 0.0
    %1362 = vmatpush1.msra.mxu0 0.0
    %1363 = vmatprep.subr.mxu0 0.0
    %1364 = vmatpush1.msra.mxu0 0.0
    %1365 = vmatprep.subr.mxu0 0.0
    %1366 = vmatpush1.msra.mxu0 0.0
    %1367 = vmatprep.subr.mxu0 0.0
    %1368 = vmatpush1.msra.mxu0 0.0
    %1369 = vmatprep.subr.mxu0 0.0
    %1370 = vmatpush1.msra.mxu0 0.0
    %1371 = vmatprep.subr.mxu0 0.0
    %1372 = vmatpush1.msra.mxu0 0.0
    %1373 = vmatprep.subr.mxu0 0.0
    %1374 = vmatpush1.msra.mxu0 0.0
    %1375 = vmatprep.subr.mxu0 0.0
    %1376 = vmatpush1.msra.mxu0 0.0
    %1377 = vmatprep.subr.mxu0 0.0
    %1378 = vmatpush1.msra.mxu0 0.0
    %1379 = vmatprep.subr.mxu0 0.0
    %1380 = vmatpush1.msra.mxu0 0.0
    %1381 = vmatprep.subr.mxu0 0.0
    %1382 = vmatpush1.msra.mxu0 0.0
    %1383 = vmatprep.subr.mxu0 0.0
    %1384 = vmatpush1.msra.mxu0 0.0
    %1385 = vmatprep.subr.mxu0 0.0
    %1386 = vmatpush1.msra.mxu0 0.0
    %1387 = vmatprep.mubr.f32.mxu0 0.0
    %1388 = vmatmul.mubr.f32.gmra.mrb[0].mxu0 %v1321
    %v1389 = vpop.f32.mrb[0].mxu0
    %v1390 = vadd.f32 0.0, %v1389
    %v1391 = vpop.f32.mrb[0].mxu0
    %1392 = vdwg.mxu0
    %1393 = vrot.lane.b32.xlu0 %v147, 40
    %v1394 = vpop.permute.xlu0 %1393
    %v1397 = vsel %vm153, %v1316, 0
    %1399 = vmatprep.subr.mxu0 0.0
    %1400 = vmatpush1.msra.mxu0 %v1394
    %1401 = vmatprep.subr.mxu0 0.0
    %1402 = vmatpush1.msra.mxu0 0.0
    %1403 = vmatprep.subr.mxu0 0.0
    %1404 = vmatpush1.msra.mxu0 0.0
    %1405 = vmatprep.subr.mxu0 0.0
    %1406 = vmatpush1.msra.mxu0 0.0
    %1407 = vmatprep.subr.mxu0 0.0
    %1408 = vmatpush1.msra.mxu0 0.0
    %1409 = vmatprep.subr.mxu0 0.0
    %1410 = vmatpush1.msra.mxu0 0.0
    %1411 = vmatprep.subr.mxu0 0.0
    %1412 = vmatpush1.msra.mxu0 0.0
    %1413 = vmatprep.subr.mxu0 0.0
    %1414 = vmatpush1.msra.mxu0 0.0
    %1415 = vmatprep.subr.mxu0 0.0
    %1416 = vmatpush1.msra.mxu0 0.0
    %1417 = vmatprep.subr.mxu0 0.0
    %1418 = vmatpush1.msra.mxu0 0.0
    %1419 = vmatprep.subr.mxu0 0.0
    %1420 = vmatpush1.msra.mxu0 0.0
    %1421 = vmatprep.subr.mxu0 0.0
    %1422 = vmatpush1.msra.mxu0 0.0
    %1423 = vmatprep.subr.mxu0 0.0
    %1424 = vmatpush1.msra.mxu0 0.0
    %1425 = vmatprep.subr.mxu0 0.0
    %1426 = vmatpush1.msra.mxu0 0.0
    %1427 = vmatprep.subr.mxu0 0.0
    %1428 = vmatpush1.msra.mxu0 0.0
    %1429 = vmatprep.subr.mxu0 0.0
    %1430 = vmatpush1.msra.mxu0 0.0
    %1431 = vmatprep.subr.mxu0 0.0
    %1432 = vmatpush1.msra.mxu0 0.0
    %1433 = vmatprep.subr.mxu0 0.0
    %1434 = vmatpush1.msra.mxu0 0.0
    %1435 = vmatprep.subr.mxu0 0.0
    %1436 = vmatpush1.msra.mxu0 0.0
    %1437 = vmatprep.subr.mxu0 0.0
    %1438 = vmatpush1.msra.mxu0 0.0
    %1439 = vmatprep.subr.mxu0 0.0
    %1440 = vmatpush1.msra.mxu0 0.0
    %1441 = vmatprep.subr.mxu0 0.0
    %1442 = vmatpush1.msra.mxu0 0.0
    %1443 = vmatprep.subr.mxu0 0.0
    %1444 = vmatpush1.msra.mxu0 0.0
    %1445 = vmatprep.subr.mxu0 0.0
    %1446 = vmatpush1.msra.mxu0 0.0
    %1447 = vmatprep.subr.mxu0 0.0
    %1448 = vmatpush1.msra.mxu0 0.0
    %1449 = vmatprep.subr.mxu0 0.0
    %1450 = vmatpush1.msra.mxu0 0.0
    %1451 = vmatprep.subr.mxu0 0.0
    %1452 = vmatpush1.msra.mxu0 0.0
    %1453 = vmatprep.subr.mxu0 0.0
    %1454 = vmatpush1.msra.mxu0 0.0
    %1455 = vmatprep.subr.mxu0 0.0
    %1456 = vmatpush1.msra.mxu0 0.0
    %1457 = vmatprep.subr.mxu0 0.0
    %1458 = vmatpush1.msra.mxu0 0.0
    %1459 = vmatprep.subr.mxu0 0.0
    %1460 = vmatpush1.msra.mxu0 0.0
    %1461 = vmatprep.subr.mxu0 0.0
    %1462 = vmatpush1.msra.mxu0 0.0
    %1463 = vmatprep.mubr.f32.mxu0 0.0
    %1464 = vmatmul.mubr.f32.gmra.mrb[0].mxu0 %v1397
    %v1465 = vpop.f32.mrb[0].mxu0
    %v1466 = vadd.f32 0.0, %v1465
    %v1467 = vpop.f32.mrb[0].mxu0
    %1468 = vdwg.mxu0
    %1469 = vst.msk [vmem:[#allocation9] sm:$0xff] %vm153, %v324
    %1470 = vst.msk [vmem:[#allocation9 + $0x8] sm:$0xff] %vm153, %v654
    %1471 = vst.msk [vmem:[#allocation9 + $0x10] sm:$0xff] %vm153, %v984
    %1472 = vst.msk [vmem:[#allocation9 + $0x18] sm:$0xff] %vm153, %v1314
    %1473 = vst.msk [vmem:[#allocation9 + $0x20] sm:$0xff] %vm153, %v326
    %1474 = vst.msk [vmem:[#allocation9 + $0x28] sm:$0xff] %vm153, %v656
    %1475 = vst.msk [vmem:[#allocation9 + $0x30] sm:$0xff] %vm153, %v986
    %1476 = vst.msk [vmem:[#allocation9 + $0x38] sm:$0xff] %vm153, %v1316
    %1479 = vrot.lane.b32.xlu0 %v730, 8
    %v1480 = vpop.permute.xlu0 %1479
    %1481 = vrot.lane.b32.xlu0 %v806, 8
    %v1482 = vpop.permute.xlu0 %1481
    %1487 = vrot.lane.b32.xlu0 %v1060, 16
    %v1488 = vpop.permute.xlu0 %1487
    %1489 = vrot.lane.b32.xlu0 %v1136, 16
    %v1490 = vpop.permute.xlu0 %1489
    %1495 = vrot.lane.b32.xlu0 %v1390, 24
    %v1496 = vpop.permute.xlu0 %1495
    %1497 = vrot.lane.b32.xlu0 %v1466, 24
    %v1498 = vpop.permute.xlu0 %1497
    %v1501 = vsel %vm153, %v400, %v1480
    %v1502 = vsel %vm153, %v476, %v1482
    %vm1503 = vcmask 130048
    %v1504 = vsel %vm1503, %v1501, %v1488
    %v1505 = vsel %vm1503, %v1502, %v1490
    %vm1506 = vcmask 195584
    %v1507 = vsel %vm1506, %v1504, %v1496
    %v1508 = vsel %vm1506, %v1505, %v1498
    %v1509 = vld [vmem:[#allocation7] sm:$0xff]
    %v1510 = vld [vmem:[#allocation7 + $0x8] sm:$0xff]
    %v1511 = vld [vmem:[#allocation7 + $0x10] sm:$0xff]
    %v1512 = vld [vmem:[#allocation7 + $0x18] sm:$0xff]
    %v1513 = vld [vmem:[%s3] sm:$0x1]
    %v1515 = vlaneseq
    %v1516 = vshrl.u32 %v1515, 7
    %v1517 = vsub.s32 0, %v1516
    %v1518 = vrot.slane %v1513, %v1517
    %v1521 = vsel %vm68, %v1507, 0
    %v1524 = vsel %vm68, %v1508, 0
    %1526 = vmatprep.subr.mxu0 0.0
    %1527 = vmatpush1.msra.mxu0 %v1509
    %1528 = vmatprep.subr.mxu0 0.0
    %1529 = vmatpush1.msra.mxu0 %v1510
    %1530 = vmatprep.subr.mxu0 0.0
    %1531 = vmatpush1.msra.mxu0 %v1511
    %1532 = vmatprep.subr.mxu0 0.0
    %1533 = vmatpush1.msra.mxu0 %v1512
    %1534 = vmatprep.subr.mxu0 0.0
    %1535 = vmatpush1.msra.mxu0 0.0
    %1536 = vmatprep.subr.mxu0 0.0
    %1537 = vmatpush1.msra.mxu0 0.0
    %1538 = vmatprep.subr.mxu0 0.0
    %1539 = vmatpush1.msra.mxu0 0.0
    %1540 = vmatprep.subr.mxu0 0.0
    %1541 = vmatpush1.msra.mxu0 0.0
    %1542 = vmatprep.subr.mxu0 0.0
    %1543 = vmatpush1.msra.mxu0 0.0
    %1544 = vmatprep.subr.mxu0 0.0
    %1545 = vmatpush1.msra.mxu0 0.0
    %1546 = vmatprep.subr.mxu0 0.0
    %1547 = vmatpush1.msra.mxu0 0.0
    %1548 = vmatprep.subr.mxu0 0.0
    %1549 = vmatpush1.msra.mxu0 0.0
    %1550 = vmatprep.subr.mxu0 0.0
    %1551 = vmatpush1.msra.mxu0 0.0
    %1552 = vmatprep.subr.mxu0 0.0
    %1553 = vmatpush1.msra.mxu0 0.0
    %1554 = vmatprep.subr.mxu0 0.0
    %1555 = vmatpush1.msra.mxu0 0.0
    %1556 = vmatprep.subr.mxu0 0.0
    %1557 = vmatpush1.msra.mxu0 0.0
    %1558 = vmatprep.subr.mxu0 0.0
    %1559 = vmatpush1.msra.mxu0 0.0
    %1560 = vmatprep.subr.mxu0 0.0
    %1561 = vmatpush1.msra.mxu0 0.0
    %1562 = vmatprep.subr.mxu0 0.0
    %1563 = vmatpush1.msra.mxu0 0.0
    %1564 = vmatprep.subr.mxu0 0.0
    %1565 = vmatpush1.msra.mxu0 0.0
    %1566 = vmatprep.subr.mxu0 0.0
    %1567 = vmatpush1.msra.mxu0 0.0
    %1568 = vmatprep.subr.mxu0 0.0
    %1569 = vmatpush1.msra.mxu0 0.0
    %1570 = vmatprep.subr.mxu0 0.0
    %1571 = vmatpush1.msra.mxu0 0.0
    %1572 = vmatprep.subr.mxu0 0.0
    %1573 = vmatpush1.msra.mxu0 0.0
    %1574 = vmatprep.subr.mxu0 0.0
    %1575 = vmatpush1.msra.mxu0 0.0
    %1576 = vmatprep.subr.mxu0 0.0
    %1577 = vmatpush1.msra.mxu0 0.0
    %1578 = vmatprep.subr.mxu0 0.0
    %1579 = vmatpush1.msra.mxu0 0.0
    %1580 = vmatprep.subr.mxu0 0.0
    %1581 = vmatpush1.msra.mxu0 0.0
    %1582 = vmatprep.subr.mxu0 0.0
    %1583 = vmatpush1.msra.mxu0 0.0
    %1584 = vmatprep.subr.mxu0 0.0
    %1585 = vmatpush1.msra.mxu0 0.0
    %1586 = vmatprep.subr.mxu0 0.0
    %1587 = vmatpush1.msra.mxu0 0.0
    %1588 = vmatprep.subr.mxu0 0.0
    %1589 = vmatpush1.msra.mxu0 0.0
    %1590 = vmatprep.mubr.f32.mxu0 0.0
    %1591 = vmatmul.mubr.f32.gmra.mrb[0].mxu0 %v1521
    %v1592 = vpop.f32.mrb[0].mxu0
    %v1593 = vadd.f32 %v1518, %v1592
    %v1594 = vpop.f32.mrb[0].mxu0
    %1595 = vmatprep.mubr.f32.mxu0 0.0
    %1596 = vmatmul.mubr.f32.gmra.mrb[0].mxu0 %v1524
    %v1597 = vpop.f32.mrb[0].mxu0
    %v1598 = vadd.f32 %v1518, %v1597
    %v1599 = vpop.f32.mrb[0].mxu0
    %1600 = vdwg.mxu0
    %1601 = vst.msk [vmem:[#allocation8] sm:$0xff] %vm68, %v1593
    %1602 = vst.msk [vmem:[#allocation8 + $0x8] sm:$0xff] %vm68, %v1598
    // Predicated region
    $region30: #{boring_attention_forward.1} parent=1 // pred_check
      _
    $region31: #{boring_attention_forward.1} parent=1 // pred_check_branch
      %1604 = sbr.rel (0) target = $region33
    $region32: #{boring_attention_forward.1} parent=1 // pred_region
      %s1606 = ssub.s32 256, 256
      %1607 = vsyncadd [#allocation4], %s1606
      %s1608 = sshll.u32 [#allocation8], 4
      %s1609 = int_to_ptr.vmem [resolvable:$true] %s1608
      %1614 = dma.vmem_to_hbm [thread:$0]  %s1609, 256, %s4, [#allocation4], 128, 128, 8
    $region33: #{boring_attention_forward.1} parent=1 // pred_fallthru
      _
    // Predicated region
    $region34: #{boring_attention_forward.1} parent=1 // pred_check
      _
    $region35: #{boring_attention_forward.1} parent=1 // pred_check_branch
      %1616 = sbr.rel (0) target = $region37
    $region36: #{boring_attention_forward.1} parent=1 // pred_region
      %s1618 = ssub.s32 1024, 1024
      %1619 = vsyncadd [#allocation10], %s1618
      %s1620 = sshll.u32 [#allocation9], 4
      %s1621 = int_to_ptr.vmem [resolvable:$true] %s1620
      %1626 = dma.vmem_to_hbm [thread:$0]  %s1621, 1024, %s5, [#allocation10], 128, 128, 8
    $region37: #{boring_attention_forward.1} parent=1 // pred_fallthru
      _
    // Predicated region
    $region38: #{boring_attention_forward.1} parent=1 // pred_check
      _
    $region39: #{boring_attention_forward.1} parent=1 // pred_check_branch
      %1628 = sbr.rel (0) target = $region41
    $region40: #{boring_attention_forward.1} parent=1 // pred_region
      %1629 = dma.done [#allocation4], 256
    $region41: #{boring_attention_forward.1} parent=1 // pred_fallthru
      _
    // Predicated region
    $region42: #{boring_attention_forward.1} parent=1 // pred_check
      _
    $region43: #{boring_attention_forward.1} parent=1 // pred_check_branch
      %1631 = sbr.rel (0) target = $region45
    $region44: #{boring_attention_forward.1} parent=1 // pred_region
      %1632 = dma.done [#allocation10], 1024
    $region45: #{boring_attention_forward.1} parent=1 // pred_fallthru
      _
    %1633 = vsyncpa [#allocation3], 1
    %1634 = vsyncpa [#allocation6], 1
    %1635 = vsyncpa [#allocation4], 1
    %1636 = vsyncpa [#allocation10], 1

</llo_original>
